<compile_context>
chip_gen: v7x
topology: tpu7x:2x2x1
jax: 0.10.0
libtpu: 0.0.40
codegen_flags: <defaults>
</compile_context>

<pallas_src>
import functools

import jax
import jax.numpy as jnp
from jax.experimental import pallas as pl
from jax.experimental.pallas import tpu as pltpu


def _caps_kernel(x_ref, w_ref, bv_ref, bl_ref, cb_ref, e_ref, o_ref, *, C, N, D):
    MV = N * D  # value lanes, flattened index n*D + e

    # One batched MXU matmul: (C, TB, K) x (C, K, MV + C*N) -> (C, TB, MV + C*N)
    res = jnp.einsum('cbk,ckm->cbm', x_ref[...], w_ref[...],
                     preferred_element_type=jnp.float32)

    # Per-input-capsule values (ConvTrans folded with CapsAct): v[c, b, n*D + e]
    v = res[:, :, :MV] + bv_ref[...]                              # (C, TB, MV)

    # Attention logits (ConvTrans folded with the Att conv3d), summed over input
    # capsules; lane index = o*N + n (o = attention output channel).
    logits = jnp.sum(res[:, :, MV:], axis=0) + bl_ref[...]        # (TB, C*N)

    # Softmax over o (groups of N contiguous lanes), unrolled — C is small.
    parts = [logits[:, o * N:(o + 1) * N] for o in range(C)]      # each (TB, N)
    m = parts[0]
    for o in range(1, C):
        m = jnp.maximum(m, parts[o])
    exps = [jnp.exp(p - m) for p in parts]
    s = exps[0]
    for o in range(1, C):
        s = s + exps[o]
    # NOTE: pl.reciprocal(s, approx=True) would move this divide onto the EUP,
    # but the exact divide is kept so the 1e-3 accuracy check is unconditionally
    # safe; it only touches a (TB, N) tile, so the cost is negligible.
    inv = 1.0 / s                                                  # (TB, N)

    # Attention-weighted sum over input capsules.  att_o @ E broadcasts each
    # per-n weight across its D output lanes on the MXU (no XLU relayouts).
    E = e_ref[...]
    acc = jnp.zeros(v.shape[1:], jnp.float32)                      # (TB, MV)
    for o in range(C):
        att_o = exps[o] * inv                                      # (TB, N)
        att_exp = jnp.dot(att_o, E, preferred_element_type=jnp.float32)
        acc = acc + att_exp * v[o]

    o_ref[...] = (acc + cb_ref[...]).astype(o_ref.dtype)


def fully_conv_caps_forward(x, conv_w, conv_b, att_w, caps_w, caps_b,
                            n_channels, dim_capsule):
    """x: (B, input_ch, input_dim, H, W); params in their PyTorch shapes."""
    B, C, Din, H, W = x.shape
    N, D = n_channels, dim_capsule
    K = Din * H * W
    MV, ML = N * D, C * N
    hp = jax.lax.Precision.HIGHEST

    # TODO(synk): F.dropout(p=0.5) runs in train mode in the reference; the
    # stochastic mask has no deterministic equivalent, so it is treated as
    # identity (eval-mode semantics).

    # --- host-side weight folding (weights only, exact algebra, tiny) ---
    W4 = conv_w.reshape(C, N, D, K).astype(jnp.float32)    # [c, n, d, k]
    B3 = conv_b.reshape(C, N, D).astype(jnp.float32)       # [c, n, d]
    A4 = att_w.reshape(N, C, C, D).astype(jnp.float32)     # [n, o(out), c(in), d]
    CW = caps_w.reshape(N, D, D).astype(jnp.float32)       # [n, e(out), d(in)]
    CB = caps_b.reshape(N, D).astype(jnp.float32)          # [n, e]

    WO = jnp.einsum('cndk,ned->ckne', W4, CW, precision=hp).reshape(C, K, MV)
    bO = jnp.einsum('cnd,ned->cne', B3, CW, precision=hp).reshape(C, 1, MV)
    WL = jnp.einsum('cndk,nocd->ckon', W4, A4, precision=hp).reshape(C, K, ML)
    bL = jnp.einsum('cnd,nocd->on', B3, A4, precision=hp).reshape(1, ML)
    Wcat = jnp.concatenate([WO, WL], axis=-1)               # (C, K, MV + ML)
    CBf = CB.reshape(1, MV)
    E = jnp.kron(jnp.eye(N, dtype=jnp.float32),
                 jnp.ones((1, D), jnp.float32))              # (N, MV), E[n, n*D+e]=1

    # --- batch tiling: B is the MXU row dimension; tile at 128 when large,
    # otherwise pad to one sublane-aligned tile. ---
    TB = 128 if B >= 128 else ((B + 7) // 8) * 8
    B_pad = ((B + TB - 1) // TB) * TB
    x_k = jnp.transpose(x, (1, 0, 2, 3, 4)).reshape(C, B, K).astype(jnp.float32)
    if B_pad != B:
        x_k = jnp.pad(x_k, ((0, 0), (0, B_pad - B), (0, 0)))

    # VMEM note: the resident fused weight is C*K*(MV+ML)*4 bytes (~0.7 MB at the
    # demo sizes).  For very large K = Din*H*W on v7x (64 MiB VMEM), add a K grid
    # axis ("arbitrary", last) with an f32 accumulator scratch.
    grid = (B_pad // TB,)
    kernel = functools.partial(_caps_kernel, C=C, N=N, D=D)
    out_slab = pl.pallas_call(
        kernel,
        out_shape=jax.ShapeDtypeStruct((B_pad, MV), jnp.float32),
        grid_spec=pltpu.PrefetchScalarGridSpec(
            num_scalar_prefetch=0,
            grid=grid,
            in_specs=[
                pl.BlockSpec((C, TB, K), lambda b: (0, b, 0)),        # x batch tile
                pl.BlockSpec((C, K, MV + ML), lambda b: (0, 0, 0)),   # fused weights (resident)
                pl.BlockSpec((C, 1, MV), lambda b: (0, 0, 0)),        # fused value bias
                pl.BlockSpec((1, ML), lambda b: (0, 0)),              # fused logit bias
                pl.BlockSpec((1, MV), lambda b: (0, 0)),              # CapsAct bias
                pl.BlockSpec((N, MV), lambda b: (0, 0)),              # expansion matrix
            ],
            out_specs=pl.BlockSpec((TB, MV), lambda b: (b, 0)),
        ),
        compiler_params=pltpu.CompilerParams(
            dimension_semantics=("parallel",)),
    )(x_k, Wcat, bO, bL, CBf, E)

    # Reproduce the torch tail exactly:
    # cat -> (B, N, D, 1, 1); reshape([-1, D, N]) (raw reinterpret); transpose(2, 1).
    out = out_slab[:B].reshape(B, D, N)      # raw reinterpret of the (N*D,) buffer
    return jnp.swapaxes(out, 1, 2)           # (B, N, D)


def _reference_forward(x, conv_w, conv_b, att_w, caps_w, caps_b, n_channels, dim_capsule):
    """Pure-JAX reference replicating the PyTorch forward (dropout treated as identity)."""
    B, C, Din, H, W = x.shape
    N, D = n_channels, dim_capsule
    K = Din * H * W
    xf = x.reshape(B, C, K)
    Wf = conv_w.reshape(C, N * D, K)
    bf = conv_b.reshape(C, N * D)
    u = jnp.einsum('bck,cmk->bcm', xf, Wf) + bf[None]        # full-window conv2d per chunk
    u = u.reshape(B, C, N, D).transpose(0, 2, 1, 3)          # (B, N, C, D)
    A = att_w.reshape(N, C, C, D)
    CWr = caps_w.reshape(N, D, D)
    CBr = caps_b.reshape(N, D)
    outs = []
    for n in range(N):
        xn = u[:, n]                                         # (B, C, D)
        logits = jnp.einsum('bcd,ocd->bo', xn, A[n])
        att = jax.nn.softmax(logits, axis=1)
        fin = jnp.sum(xn * att[:, :, None], axis=1)          # (B, D)
        outs.append(fin @ CWr[n].T + CBr[n])
    out = jnp.stack(outs, axis=1)                            # (B, N, D)
    out = out.reshape(B, D, N)
    return jnp.swapaxes(out, 1, 2)


def _xavier_uniform(key, shape, gain):
    receptive = 1
    for s in shape[2:]:
        receptive *= s
    fan_in = shape[1] * receptive
    fan_out = shape[0] * receptive
    bound = gain * (6.0 / (fan_in + fan_out)) ** 0.5
    return jax.random.uniform(key, shape, jnp.float32, -bound, bound)


if __name__ == "__main__":
    # input_shape = (B, input_ch, input_dim, height, width)
    B, C, Din, H, W = 2, 4, 8, 8, 8
    N, D = 4, 16          # n_channels, dim_capsule
    gain = 2.0 ** 0.5     # calculate_gain('relu')

    key = jax.random.PRNGKey(0)
    kx, k1, k2, k3 = jax.random.split(key, 4)

    x = jax.random.normal(kx, (B, C, Din, H, W), jnp.float32)
    att_w = _xavier_uniform(k1, (C * N, C, D, 1, 1), gain)               # Att_W
    conv_w = _xavier_uniform(k2, (C * D * N, Din, H, W), gain)           # ConvTrans_W
    conv_b = jnp.zeros((C * D * N,), jnp.float32)                        # ConvTrans_B
    caps_w = _xavier_uniform(k3, (D * N, D, 1, 1), gain)                 # CapsAct_W
    caps_b = jnp.zeros((D * N,), jnp.float32)                            # CapsAct_B

    out = fully_conv_caps_forward(x, conv_w, conv_b, att_w, caps_w, caps_b, N, D)
    out = jax.block_until_ready(out)

    ref = _reference_forward(x, conv_w, conv_b, att_w, caps_w, caps_b, N, D)
    assert out.shape == (B, N, D), out.shape
    err = float(jnp.max(jnp.abs(out - ref)))
    assert err < 1e-3, f"max abs error {err}"
    print("KERNEL_OK")
</pallas_src>

<mosaic_0001>
module attributes {stable_mosaic.version = 11 : i64} {
  func.func @_caps_kernel(%arg0: i32, %arg1: memref<4x8x512xf32, #tpu.memory_space<vmem>>, %arg2: memref<4x512x80xf32, #tpu.memory_space<vmem>>, %arg3: memref<4x1x64xf32, #tpu.memory_space<vmem>>, %arg4: memref<1x16xf32, #tpu.memory_space<vmem>>, %arg5: memref<1x64xf32, #tpu.memory_space<vmem>>, %arg6: memref<4x64xf32, #tpu.memory_space<vmem>>, %arg7: memref<8x64xf32, #tpu.memory_space<vmem>>) attributes {dimension_semantics = [#tpu.dimension_semantics<parallel>], iteration_bounds = array<i64: 1>, scalar_prefetch = 0 : i64, scratch_operands = 0 : i64, tpu.core_type = #tpu.core_type<tc>, window_params = [{transform_indices = @transform_0, window_bounds = array<i64: 4, 8, 512>}, {pipeline_mode = #tpu.pipeline_mode<synchronous>, transform_indices = @transform_1, window_bounds = array<i64: 4, 512, 80>}, {pipeline_mode = #tpu.pipeline_mode<synchronous>, transform_indices = @transform_2, window_bounds = array<i64: 4, 1, 64>}, {pipeline_mode = #tpu.pipeline_mode<synchronous>, transform_indices = @transform_3, window_bounds = array<i64: 1, 16>}, {pipeline_mode = #tpu.pipeline_mode<synchronous>, transform_indices = @transform_4, window_bounds = array<i64: 1, 64>}, {pipeline_mode = #tpu.pipeline_mode<synchronous>, transform_indices = @transform_5, window_bounds = array<i64: 4, 64>}, {transform_indices = @transform_6, window_bounds = array<i64: 8, 64>}]} {
    %c0 = arith.constant 0 : index
    %c0_0 = arith.constant 0 : index
    %c0_1 = arith.constant 0 : index
    %0 = vector.load %arg1[%c0, %c0_0, %c0_1] : memref<4x8x512xf32, #tpu.memory_space<vmem>>, vector<4x8x512xf32>
    %c0_2 = arith.constant 0 : index
    %c0_3 = arith.constant 0 : index
    %c0_4 = arith.constant 0 : index
    %1 = vector.load %arg2[%c0_2, %c0_3, %c0_4] : memref<4x512x80xf32, #tpu.memory_space<vmem>>, vector<4x512x80xf32>
    "tpu.trace_start"() <{level = 10 : i32, message = "cbk,ckm->cbm"}> : () -> ()
    %cst = arith.constant dense<0.000000e+00> : vector<4x8x80xf32>
    %2 = tpu.matmul %0, %1, %cst {dimension_numbers = #tpu.dot_dimension_numbers<[2], [1], [1], [2], [0, 0, 0, 1, 1, 2], [0], [0]>} : vector<4x8x512xf32>, vector<4x512x80xf32>, vector<4x8x80xf32> -> vector<4x8x80xf32>
    "tpu.trace_stop"() : () -> ()
    %3 = vector.extract_strided_slice %2 {offsets = [0, 0, 0], sizes = [4, 8, 64], strides = [1, 1, 1]} : vector<4x8x80xf32> to vector<4x8x64xf32>
    %c0_5 = arith.constant 0 : index
    %c0_6 = arith.constant 0 : index
    %c0_7 = arith.constant 0 : index
    %4 = vector.load %arg3[%c0_5, %c0_6, %c0_7] : memref<4x1x64xf32, #tpu.memory_space<vmem>>, vector<4x1x64xf32>
    %5 = vector.broadcast %4 : vector<4x1x64xf32> to vector<4x8x64xf32>
    %6 = arith.addf %3, %5 : vector<4x8x64xf32>
    %7 = vector.extract_strided_slice %2 {offsets = [0, 0, 64], sizes = [4, 8, 16], strides = [1, 1, 1]} : vector<4x8x80xf32> to vector<4x8x16xf32>
    %cst_8 = arith.constant dense<0.000000e+00> : vector<8x16xf32>
    %8 = vector.multi_reduction <add>, %7, %cst_8 [0] : vector<4x8x16xf32> to vector<8x16xf32>
    %c0_9 = arith.constant 0 : index
    %c0_10 = arith.constant 0 : index
    %9 = vector.load %arg4[%c0_9, %c0_10] : memref<1x16xf32, #tpu.memory_space<vmem>>, vector<1x16xf32>
    %10 = vector.broadcast %9 : vector<1x16xf32> to vector<8x16xf32>
    %11 = arith.addf %8, %10 : vector<8x16xf32>
    %12 = vector.extract_strided_slice %11 {offsets = [0, 0], sizes = [8, 4], strides = [1, 1]} : vector<8x16xf32> to vector<8x4xf32>
    %13 = vector.extract_strided_slice %11 {offsets = [0, 4], sizes = [8, 4], strides = [1, 1]} : vector<8x16xf32> to vector<8x4xf32>
    %14 = vector.extract_strided_slice %11 {offsets = [0, 8], sizes = [8, 4], strides = [1, 1]} : vector<8x16xf32> to vector<8x4xf32>
    %15 = vector.extract_strided_slice %11 {offsets = [0, 12], sizes = [8, 4], strides = [1, 1]} : vector<8x16xf32> to vector<8x4xf32>
    %16 = arith.maximumf %12, %13 : vector<8x4xf32>
    %17 = arith.maximumf %16, %14 : vector<8x4xf32>
    %18 = arith.maximumf %17, %15 : vector<8x4xf32>
    %19 = arith.subf %12, %18 : vector<8x4xf32>
    %20 = math.exp %19 : vector<8x4xf32>
    %21 = arith.subf %13, %18 : vector<8x4xf32>
    %22 = math.exp %21 : vector<8x4xf32>
    %23 = arith.subf %14, %18 : vector<8x4xf32>
    %24 = math.exp %23 : vector<8x4xf32>
    %25 = arith.subf %15, %18 : vector<8x4xf32>
    %26 = math.exp %25 : vector<8x4xf32>
    %27 = arith.addf %20, %22 : vector<8x4xf32>
    %28 = arith.addf %27, %24 : vector<8x4xf32>
    %29 = arith.addf %28, %26 : vector<8x4xf32>
    %cst_11 = arith.constant 1.000000e+00 : f32
    %30 = vector.broadcast %cst_11 : f32 to vector<8x4xf32>
    %31 = arith.divf %30, %29 : vector<8x4xf32>
    %c0_12 = arith.constant 0 : index
    %c0_13 = arith.constant 0 : index
    %32 = vector.load %arg6[%c0_12, %c0_13] : memref<4x64xf32, #tpu.memory_space<vmem>>, vector<4x64xf32>
    %cst_14 = arith.constant 0.000000e+00 : f32
    %33 = vector.broadcast %cst_14 : f32 to vector<8x64xf32>
    %34 = arith.mulf %20, %31 : vector<8x4xf32>
    %cst_15 = arith.constant dense<0.000000e+00> : vector<8x64xf32>
    %35 = tpu.matmul %34, %32, %cst_15 {dimension_numbers = #tpu.dot_dimension_numbers<[1], [0], [0], [1], [0, 0, 1, 1], [], []>} : vector<8x4xf32>, vector<4x64xf32>, vector<8x64xf32> -> vector<8x64xf32>
    %36 = vector.extract_strided_slice %6 {offsets = [0, 0, 0], sizes = [1, 8, 64], strides = [1, 1, 1]} : vector<4x8x64xf32> to vector<1x8x64xf32>
    %37 = vector.shape_cast %36 : vector<1x8x64xf32> to vector<8x64xf32>
    %38 = arith.mulf %35, %37 : vector<8x64xf32>
    %39 = arith.addf %33, %38 : vector<8x64xf32>
    %40 = arith.mulf %22, %31 : vector<8x4xf32>
    %cst_16 = arith.constant dense<0.000000e+00> : vector<8x64xf32>
    %41 = tpu.matmul %40, %32, %cst_16 {dimension_numbers = #tpu.dot_dimension_numbers<[1], [0], [0], [1], [0, 0, 1, 1], [], []>} : vector<8x4xf32>, vector<4x64xf32>, vector<8x64xf32> -> vector<8x64xf32>
    %42 = vector.extract_strided_slice %6 {offsets = [1, 0, 0], sizes = [1, 8, 64], strides = [1, 1, 1]} : vector<4x8x64xf32> to vector<1x8x64xf32>
    %43 = vector.shape_cast %42 : vector<1x8x64xf32> to vector<8x64xf32>
    %44 = arith.mulf %41, %43 : vector<8x64xf32>
    %45 = arith.addf %39, %44 : vector<8x64xf32>
    %46 = arith.mulf %24, %31 : vector<8x4xf32>
    %cst_17 = arith.constant dense<0.000000e+00> : vector<8x64xf32>
    %47 = tpu.matmul %46, %32, %cst_17 {dimension_numbers = #tpu.dot_dimension_numbers<[1], [0], [0], [1], [0, 0, 1, 1], [], []>} : vector<8x4xf32>, vector<4x64xf32>, vector<8x64xf32> -> vector<8x64xf32>
    %48 = vector.extract_strided_slice %6 {offsets = [2, 0, 0], sizes = [1, 8, 64], strides = [1, 1, 1]} : vector<4x8x64xf32> to vector<1x8x64xf32>
    %49 = vector.shape_cast %48 : vector<1x8x64xf32> to vector<8x64xf32>
    %50 = arith.mulf %47, %49 : vector<8x64xf32>
    %51 = arith.addf %45, %50 : vector<8x64xf32>
    %52 = arith.mulf %26, %31 : vector<8x4xf32>
    %cst_18 = arith.constant dense<0.000000e+00> : vector<8x64xf32>
    %53 = tpu.matmul %52, %32, %cst_18 {dimension_numbers = #tpu.dot_dimension_numbers<[1], [0], [0], [1], [0, 0, 1, 1], [], []>} : vector<8x4xf32>, vector<4x64xf32>, vector<8x64xf32> -> vector<8x64xf32>
    %54 = vector.extract_strided_slice %6 {offsets = [3, 0, 0], sizes = [1, 8, 64], strides = [1, 1, 1]} : vector<4x8x64xf32> to vector<1x8x64xf32>
    %55 = vector.shape_cast %54 : vector<1x8x64xf32> to vector<8x64xf32>
    %56 = arith.mulf %53, %55 : vector<8x64xf32>
    %57 = arith.addf %51, %56 : vector<8x64xf32>
    %c0_19 = arith.constant 0 : index
    %c0_20 = arith.constant 0 : index
    %58 = vector.load %arg5[%c0_19, %c0_20] : memref<1x64xf32, #tpu.memory_space<vmem>>, vector<1x64xf32>
    %59 = vector.broadcast %58 : vector<1x64xf32> to vector<8x64xf32>
    %60 = arith.addf %57, %59 : vector<8x64xf32>
    %c0_21 = arith.constant 0 : index
    %c0_22 = arith.constant 0 : index
    %61 = vector.load %arg7[%c0_21, %c0_22] : memref<8x64xf32, #tpu.memory_space<vmem>>, vector<8x64xf32>
    tpu.vector_store %arg7[%c0_21, %c0_22], %60 {strides = array<i32>} : memref<8x64xf32, #tpu.memory_space<vmem>>, vector<8x64xf32>,
    return
  }
  func.func @transform_0(%arg0: i32) -> (i32, i32, i32) {
    %c0_i32 = arith.constant 0 : i32
    %c0_i32_0 = arith.constant 0 : i32
    %c0_i32_1 = arith.constant 0 : i32
    return %c0_i32, %arg0, %c0_i32_0 : i32, i32, i32
  }
  func.func @transform_1(%arg0: i32) -> (i32, i32, i32) {
    %c0_i32 = arith.constant 0 : i32
    %c0_i32_0 = arith.constant 0 : i32
    %c0_i32_1 = arith.constant 0 : i32
    %c0_i32_2 = arith.constant 0 : i32
    return %c0_i32, %c0_i32_0, %c0_i32_1 : i32, i32, i32
  }
  func.func @transform_2(%arg0: i32) -> (i32, i32, i32) {
    %c0_i32 = arith.constant 0 : i32
    %c0_i32_0 = arith.constant 0 : i32
    %c0_i32_1 = arith.constant 0 : i32
    %c0_i32_2 = arith.constant 0 : i32
    return %c0_i32, %c0_i32_0, %c0_i32_1 : i32, i32, i32
  }
  func.func @transform_3(%arg0: i32) -> (i32, i32) {
    %c0_i32 = arith.constant 0 : i32
    %c0_i32_0 = arith.constant 0 : i32
    %c0_i32_1 = arith.constant 0 : i32
    return %c0_i32, %c0_i32_0 : i32, i32
  }
  func.func @transform_4(%arg0: i32) -> (i32, i32) {
    %c0_i32 = arith.constant 0 : i32
    %c0_i32_0 = arith.constant 0 : i32
    %c0_i32_1 = arith.constant 0 : i32
    return %c0_i32, %c0_i32_0 : i32, i32
  }
  func.func @transform_5(%arg0: i32) -> (i32, i32) {
    %c0_i32 = arith.constant 0 : i32
    %c0_i32_0 = arith.constant 0 : i32
    %c0_i32_1 = arith.constant 0 : i32
    return %c0_i32, %c0_i32_0 : i32, i32
  }
  func.func @transform_6(%arg0: i32) -> (i32, i32) {
    %c0_i32 = arith.constant 0 : i32
    %c0_i32_0 = arith.constant 0 : i32
    return %arg0, %c0_i32 : i32, i32
  }
}

</mosaic_0001>

<llo_original>
// kernel: tpu_custom_call.1
$region0: #{tpu_custom_call.1}
  #allocation0 [shape = 'u32[]', space=smem, size = 0x4, offset = 0x4, fixed_abs, tag = 'smem constant byte address 0x4 - core index']
  #allocation1 [shape = 'u32[144,128]{1,0:T(1,128)}', space=vmem, size = 0x12000, scoped, tag = 'internal scratch']
  %s0 = inlined_call_operand.vmem [shape: f32[4,8,512], index: 0, kind: input, shape index: {}]
  %s1 = inlined_call_operand.vmem [shape: f32[4,512,80], index: 1, kind: input, shape index: {}]
  %s2 = inlined_call_operand.vmem [shape: f32[4,1,64], index: 2, kind: input, shape index: {}]
  %s3 = inlined_call_operand.vmem [shape: f32[1,16], index: 3, kind: input, shape index: {}]
  %s4 = inlined_call_operand.vmem [shape: f32[1,64], index: 4, kind: input, shape index: {}]
  %s5 = inlined_call_operand.vmem [shape: f32[4,64], index: 5, kind: input, shape index: {}]
  %s6 = inlined_call_operand.hbm [shape: f32[8,64], index: 6, kind: output, shape index: {}]
  %s7 = sld [smem:[#allocation0]]
  $region34: #{tpu_custom_call.1} parent=0
    _
  %s9 = ssub.s32 1, %s7
  %s10 = scalar_select 0, %s9, %s7
  $region1: #{tpu_custom_call.1} parent=0
    #allocation2 [shape = 'u8[4096]{0}', space=vmem, size = 0x1000, scoped, tag = 'output window, operand 0, single buffered']
    #allocation3 [shape = 's32[1]{0}', space=sflag, size = 0x4, scoped, tag = 'scoped memory for tpu_custom_call.1']
    %11 = vsyncpa [#allocation3], 0
    // Predicated region
    $region2: #{tpu_custom_call.1} parent=1 // pred_check
      _
    $region3: #{tpu_custom_call.1} parent=1 // pred_check_branch
      %13 = sbr.rel (0) target = $region5
    $region4: #{tpu_custom_call.1} parent=1 // pred_region
      _
    $region5: #{tpu_custom_call.1} parent=1 // pred_fallthru
      _
    // Predicated region
    $region6: #{tpu_custom_call.1} parent=1 // pred_check
      _
    $region7: #{tpu_custom_call.1} parent=1 // pred_check_branch
      %15 = sbr.rel (0) target = $region9
    $region8: #{tpu_custom_call.1} parent=1 // pred_region
      _
    $region9: #{tpu_custom_call.1} parent=1 // pred_fallthru
      _
    // Predicated region
    $region10: #{tpu_custom_call.1} parent=1 // pred_check
      _
    $region11: #{tpu_custom_call.1} parent=1 // pred_check_branch
      %17 = sbr.rel (0) target = $region13
    $region12: #{tpu_custom_call.1} parent=1 // pred_region
      _
    $region13: #{tpu_custom_call.1} parent=1 // pred_fallthru
      _
    // Predicated region
    $region14: #{tpu_custom_call.1} parent=1 // pred_check
      _
    $region15: #{tpu_custom_call.1} parent=1 // pred_check_branch
      %19 = sbr.rel (0) target = $region17
    $region16: #{tpu_custom_call.1} parent=1 // pred_region
      _
    $region17: #{tpu_custom_call.1} parent=1 // pred_fallthru
      _
    // Predicated region
    $region18: #{tpu_custom_call.1} parent=1 // pred_check
      _
    $region19: #{tpu_custom_call.1} parent=1 // pred_check_branch
      %21 = sbr.rel (0) target = $region21
    $region20: #{tpu_custom_call.1} parent=1 // pred_region
      _
    $region21: #{tpu_custom_call.1} parent=1 // pred_fallthru
      _
    // Predicated region
    $region22: #{tpu_custom_call.1} parent=1 // pred_check
      _
    $region23: #{tpu_custom_call.1} parent=1 // pred_check_branch
      %23 = sbr.rel (0) target = $region25
    $region24: #{tpu_custom_call.1} parent=1 // pred_region
      _
    $region25: #{tpu_custom_call.1} parent=1 // pred_fallthru
      _
    %v24 = vld [vmem:[%s0] sm:$0xff]
    %v25 = vld [vmem:[%s0 + $0x8] sm:$0xff]
    %v26 = vld [vmem:[%s0 + $0x10] sm:$0xff]
    %v27 = vld [vmem:[%s0 + $0x18] sm:$0xff]
    %v28 = vld [vmem:[%s0 + $0x20] sm:$0xff]
    %v29 = vld [vmem:[%s0 + $0x28] sm:$0xff]
    %v30 = vld [vmem:[%s0 + $0x30] sm:$0xff]
    %v31 = vld [vmem:[%s0 + $0x38] sm:$0xff]
    %v32 = vld [vmem:[%s0 + $0x40] sm:$0xff]
    %v33 = vld [vmem:[%s0 + $0x48] sm:$0xff]
    %v34 = vld [vmem:[%s0 + $0x50] sm:$0xff]
    %v35 = vld [vmem:[%s0 + $0x58] sm:$0xff]
    %v36 = vld [vmem:[%s0 + $0x60] sm:$0xff]
    %v37 = vld [vmem:[%s0 + $0x68] sm:$0xff]
    %v38 = vld [vmem:[%s0 + $0x70] sm:$0xff]
    %v39 = vld [vmem:[%s0 + $0x78] sm:$0xff]
    %v40 = vld [vmem:[%s1] sm:$0xff]
    %v41 = vld [vmem:[%s1 + $0x8] sm:$0xff]
    %v42 = vld [vmem:[%s1 + $0x10] sm:$0xff]
    %v43 = vld [vmem:[%s1 + $0x18] sm:$0xff]
    %v44 = vld [vmem:[%s1 + $0x20] sm:$0xff]
    %v45 = vld [vmem:[%s1 + $0x28] sm:$0xff]
    %v46 = vld [vmem:[%s1 + $0x30] sm:$0xff]
    %v47 = vld [vmem:[%s1 + $0x38] sm:$0xff]
    %v48 = vld [vmem:[%s1 + $0x40] sm:$0xff]
    %v49 = vld [vmem:[%s1 + $0x48] sm:$0xff]
    %v50 = vld [vmem:[%s1 + $0x50] sm:$0xff]
    %v51 = vld [vmem:[%s1 + $0x58] sm:$0xff]
    %v52 = vld [vmem:[%s1 + $0x60] sm:$0xff]
    %v53 = vld [vmem:[%s1 + $0x68] sm:$0xff]
    %v54 = vld [vmem:[%s1 + $0x70] sm:$0xff]
    %v55 = vld [vmem:[%s1 + $0x78] sm:$0xff]
    %v56 = vld [vmem:[%s1 + $0x80] sm:$0xff]
    %v57 = vld [vmem:[%s1 + $0x88] sm:$0xff]
    %v58 = vld [vmem:[%s1 + $0x90] sm:$0xff]
    %v59 = vld [vmem:[%s1 + $0x98] sm:$0xff]
    %v60 = vld [vmem:[%s1 + $0xa0] sm:$0xff]
    %v61 = vld [vmem:[%s1 + $0xa8] sm:$0xff]
    %v62 = vld [vmem:[%s1 + $0xb0] sm:$0xff]
    %v63 = vld [vmem:[%s1 + $0xb8] sm:$0xff]
    %v64 = vld [vmem:[%s1 + $0xc0] sm:$0xff]
    %v65 = vld [vmem:[%s1 + $0xc8] sm:$0xff]
    %v66 = vld [vmem:[%s1 + $0xd0] sm:$0xff]
    %v67 = vld [vmem:[%s1 + $0xd8] sm:$0xff]
    %v68 = vld [vmem:[%s1 + $0xe0] sm:$0xff]
    %v69 = vld [vmem:[%s1 + $0xe8] sm:$0xff]
    %v70 = vld [vmem:[%s1 + $0xf0] sm:$0xff]
    %v71 = vld [vmem:[%s1 + $0xf8] sm:$0xff]
    %v72 = vld [vmem:[%s1 + $0x100] sm:$0xff]
    %v73 = vld [vmem:[%s1 + $0x108] sm:$0xff]
    %v74 = vld [vmem:[%s1 + $0x110] sm:$0xff]
    %v75 = vld [vmem:[%s1 + $0x118] sm:$0xff]
    %v76 = vld [vmem:[%s1 + $0x120] sm:$0xff]
    %v77 = vld [vmem:[%s1 + $0x128] sm:$0xff]
    %v78 = vld [vmem:[%s1 + $0x130] sm:$0xff]
    %v79 = vld [vmem:[%s1 + $0x138] sm:$0xff]
    %v80 = vld [vmem:[%s1 + $0x140] sm:$0xff]
    %v81 = vld [vmem:[%s1 + $0x148] sm:$0xff]
    %v82 = vld [vmem:[%s1 + $0x150] sm:$0xff]
    %v83 = vld [vmem:[%s1 + $0x158] sm:$0xff]
    %v84 = vld [vmem:[%s1 + $0x160] sm:$0xff]
    %v85 = vld [vmem:[%s1 + $0x168] sm:$0xff]
    %v86 = vld [vmem:[%s1 + $0x170] sm:$0xff]
    %v87 = vld [vmem:[%s1 + $0x178] sm:$0xff]
    %v88 = vld [vmem:[%s1 + $0x180] sm:$0xff]
    %v89 = vld [vmem:[%s1 + $0x188] sm:$0xff]
    %v90 = vld [vmem:[%s1 + $0x190] sm:$0xff]
    %v91 = vld [vmem:[%s1 + $0x198] sm:$0xff]
    %v92 = vld [vmem:[%s1 + $0x1a0] sm:$0xff]
    %v93 = vld [vmem:[%s1 + $0x1a8] sm:$0xff]
    %v94 = vld [vmem:[%s1 + $0x1b0] sm:$0xff]
    %v95 = vld [vmem:[%s1 + $0x1b8] sm:$0xff]
    %v96 = vld [vmem:[%s1 + $0x1c0] sm:$0xff]
    %v97 = vld [vmem:[%s1 + $0x1c8] sm:$0xff]
    %v98 = vld [vmem:[%s1 + $0x1d0] sm:$0xff]
    %v99 = vld [vmem:[%s1 + $0x1d8] sm:$0xff]
    %v100 = vld [vmem:[%s1 + $0x1e0] sm:$0xff]
    %v101 = vld [vmem:[%s1 + $0x1e8] sm:$0xff]
    %v102 = vld [vmem:[%s1 + $0x1f0] sm:$0xff]
    %v103 = vld [vmem:[%s1 + $0x1f8] sm:$0xff]
    %v104 = vld [vmem:[%s1 + $0x200] sm:$0xff]
    %v105 = vld [vmem:[%s1 + $0x208] sm:$0xff]
    %v106 = vld [vmem:[%s1 + $0x210] sm:$0xff]
    %v107 = vld [vmem:[%s1 + $0x218] sm:$0xff]
    %v108 = vld [vmem:[%s1 + $0x220] sm:$0xff]
    %v109 = vld [vmem:[%s1 + $0x228] sm:$0xff]
    %v110 = vld [vmem:[%s1 + $0x230] sm:$0xff]
    %v111 = vld [vmem:[%s1 + $0x238] sm:$0xff]
    %v112 = vld [vmem:[%s1 + $0x240] sm:$0xff]
    %v113 = vld [vmem:[%s1 + $0x248] sm:$0xff]
    %v114 = vld [vmem:[%s1 + $0x250] sm:$0xff]
    %v115 = vld [vmem:[%s1 + $0x258] sm:$0xff]
    %v116 = vld [vmem:[%s1 + $0x260] sm:$0xff]
    %v117 = vld [vmem:[%s1 + $0x268] sm:$0xff]
    %v118 = vld [vmem:[%s1 + $0x270] sm:$0xff]
    %v119 = vld [vmem:[%s1 + $0x278] sm:$0xff]
    %v120 = vld [vmem:[%s1 + $0x280] sm:$0xff]
    %v121 = vld [vmem:[%s1 + $0x288] sm:$0xff]
    %v122 = vld [vmem:[%s1 + $0x290] sm:$0xff]
    %v123 = vld [vmem:[%s1 + $0x298] sm:$0xff]
    %v124 = vld [vmem:[%s1 + $0x2a0] sm:$0xff]
    %v125 = vld [vmem:[%s1 + $0x2a8] sm:$0xff]
    %v126 = vld [vmem:[%s1 + $0x2b0] sm:$0xff]
    %v127 = vld [vmem:[%s1 + $0x2b8] sm:$0xff]
    %v128 = vld [vmem:[%s1 + $0x2c0] sm:$0xff]
    %v129 = vld [vmem:[%s1 + $0x2c8] sm:$0xff]
    %v130 = vld [vmem:[%s1 + $0x2d0] sm:$0xff]
    %v131 = vld [vmem:[%s1 + $0x2d8] sm:$0xff]
    %v132 = vld [vmem:[%s1 + $0x2e0] sm:$0xff]
    %v133 = vld [vmem:[%s1 + $0x2e8] sm:$0xff]
    %v134 = vld [vmem:[%s1 + $0x2f0] sm:$0xff]
    %v135 = vld [vmem:[%s1 + $0x2f8] sm:$0xff]
    %v136 = vld [vmem:[%s1 + $0x300] sm:$0xff]
    %v137 = vld [vmem:[%s1 + $0x308] sm:$0xff]
    %v138 = vld [vmem:[%s1 + $0x310] sm:$0xff]
    %v139 = vld [vmem:[%s1 + $0x318] sm:$0xff]
    %v140 = vld [vmem:[%s1 + $0x320] sm:$0xff]
    %v141 = vld [vmem:[%s1 + $0x328] sm:$0xff]
    %v142 = vld [vmem:[%s1 + $0x330] sm:$0xff]
    %v143 = vld [vmem:[%s1 + $0x338] sm:$0xff]
    %v144 = vld [vmem:[%s1 + $0x340] sm:$0xff]
    %v145 = vld [vmem:[%s1 + $0x348] sm:$0xff]
    %v146 = vld [vmem:[%s1 + $0x350] sm:$0xff]
    %v147 = vld [vmem:[%s1 + $0x358] sm:$0xff]
    %v148 = vld [vmem:[%s1 + $0x360] sm:$0xff]
    %v149 = vld [vmem:[%s1 + $0x368] sm:$0xff]
    %v150 = vld [vmem:[%s1 + $0x370] sm:$0xff]
    %v151 = vld [vmem:[%s1 + $0x378] sm:$0xff]
    %v152 = vld [vmem:[%s1 + $0x380] sm:$0xff]
    %v153 = vld [vmem:[%s1 + $0x388] sm:$0xff]
    %v154 = vld [vmem:[%s1 + $0x390] sm:$0xff]
    %v155 = vld [vmem:[%s1 + $0x398] sm:$0xff]
    %v156 = vld [vmem:[%s1 + $0x3a0] sm:$0xff]
    %v157 = vld [vmem:[%s1 + $0x3a8] sm:$0xff]
    %v158 = vld [vmem:[%s1 + $0x3b0] sm:$0xff]
    %v159 = vld [vmem:[%s1 + $0x3b8] sm:$0xff]
    %v160 = vld [vmem:[%s1 + $0x3c0] sm:$0xff]
    %v161 = vld [vmem:[%s1 + $0x3c8] sm:$0xff]
    %v162 = vld [vmem:[%s1 + $0x3d0] sm:$0xff]
    %v163 = vld [vmem:[%s1 + $0x3d8] sm:$0xff]
    %v164 = vld [vmem:[%s1 + $0x3e0] sm:$0xff]
    %v165 = vld [vmem:[%s1 + $0x3e8] sm:$0xff]
    %v166 = vld [vmem:[%s1 + $0x3f0] sm:$0xff]
    %v167 = vld [vmem:[%s1 + $0x3f8] sm:$0xff]
    %v168 = vld [vmem:[%s1 + $0x400] sm:$0xff]
    %v169 = vld [vmem:[%s1 + $0x408] sm:$0xff]
    %v170 = vld [vmem:[%s1 + $0x410] sm:$0xff]
    %v171 = vld [vmem:[%s1 + $0x418] sm:$0xff]
    %v172 = vld [vmem:[%s1 + $0x420] sm:$0xff]
    %v173 = vld [vmem:[%s1 + $0x428] sm:$0xff]
    %v174 = vld [vmem:[%s1 + $0x430] sm:$0xff]
    %v175 = vld [vmem:[%s1 + $0x438] sm:$0xff]
    %v176 = vld [vmem:[%s1 + $0x440] sm:$0xff]
    %v177 = vld [vmem:[%s1 + $0x448] sm:$0xff]
    %v178 = vld [vmem:[%s1 + $0x450] sm:$0xff]
    %v179 = vld [vmem:[%s1 + $0x458] sm:$0xff]
    %v180 = vld [vmem:[%s1 + $0x460] sm:$0xff]
    %v181 = vld [vmem:[%s1 + $0x468] sm:$0xff]
    %v182 = vld [vmem:[%s1 + $0x470] sm:$0xff]
    %v183 = vld [vmem:[%s1 + $0x478] sm:$0xff]
    %v184 = vld [vmem:[%s1 + $0x480] sm:$0xff]
    %v185 = vld [vmem:[%s1 + $0x488] sm:$0xff]
    %v186 = vld [vmem:[%s1 + $0x490] sm:$0xff]
    %v187 = vld [vmem:[%s1 + $0x498] sm:$0xff]
    %v188 = vld [vmem:[%s1 + $0x4a0] sm:$0xff]
    %v189 = vld [vmem:[%s1 + $0x4a8] sm:$0xff]
    %v190 = vld [vmem:[%s1 + $0x4b0] sm:$0xff]
    %v191 = vld [vmem:[%s1 + $0x4b8] sm:$0xff]
    %v192 = vld [vmem:[%s1 + $0x4c0] sm:$0xff]
    %v193 = vld [vmem:[%s1 + $0x4c8] sm:$0xff]
    %v194 = vld [vmem:[%s1 + $0x4d0] sm:$0xff]
    %v195 = vld [vmem:[%s1 + $0x4d8] sm:$0xff]
    %v196 = vld [vmem:[%s1 + $0x4e0] sm:$0xff]
    %v197 = vld [vmem:[%s1 + $0x4e8] sm:$0xff]
    %v198 = vld [vmem:[%s1 + $0x4f0] sm:$0xff]
    %v199 = vld [vmem:[%s1 + $0x4f8] sm:$0xff]
    %v200 = vld [vmem:[%s1 + $0x500] sm:$0xff]
    %v201 = vld [vmem:[%s1 + $0x508] sm:$0xff]
    %v202 = vld [vmem:[%s1 + $0x510] sm:$0xff]
    %v203 = vld [vmem:[%s1 + $0x518] sm:$0xff]
    %v204 = vld [vmem:[%s1 + $0x520] sm:$0xff]
    %v205 = vld [vmem:[%s1 + $0x528] sm:$0xff]
    %v206 = vld [vmem:[%s1 + $0x530] sm:$0xff]
    %v207 = vld [vmem:[%s1 + $0x538] sm:$0xff]
    %v208 = vld [vmem:[%s1 + $0x540] sm:$0xff]
    %v209 = vld [vmem:[%s1 + $0x548] sm:$0xff]
    %v210 = vld [vmem:[%s1 + $0x550] sm:$0xff]
    %v211 = vld [vmem:[%s1 + $0x558] sm:$0xff]
    %v212 = vld [vmem:[%s1 + $0x560] sm:$0xff]
    %v213 = vld [vmem:[%s1 + $0x568] sm:$0xff]
    %v214 = vld [vmem:[%s1 + $0x570] sm:$0xff]
    %v215 = vld [vmem:[%s1 + $0x578] sm:$0xff]
    %v216 = vld [vmem:[%s1 + $0x580] sm:$0xff]
    %v217 = vld [vmem:[%s1 + $0x588] sm:$0xff]
    %v218 = vld [vmem:[%s1 + $0x590] sm:$0xff]
    %v219 = vld [vmem:[%s1 + $0x598] sm:$0xff]
    %v220 = vld [vmem:[%s1 + $0x5a0] sm:$0xff]
    %v221 = vld [vmem:[%s1 + $0x5a8] sm:$0xff]
    %v222 = vld [vmem:[%s1 + $0x5b0] sm:$0xff]
    %v223 = vld [vmem:[%s1 + $0x5b8] sm:$0xff]
    %v224 = vld [vmem:[%s1 + $0x5c0] sm:$0xff]
    %v225 = vld [vmem:[%s1 + $0x5c8] sm:$0xff]
    %v226 = vld [vmem:[%s1 + $0x5d0] sm:$0xff]
    %v227 = vld [vmem:[%s1 + $0x5d8] sm:$0xff]
    %v228 = vld [vmem:[%s1 + $0x5e0] sm:$0xff]
    %v229 = vld [vmem:[%s1 + $0x5e8] sm:$0xff]
    %v230 = vld [vmem:[%s1 + $0x5f0] sm:$0xff]
    %v231 = vld [vmem:[%s1 + $0x5f8] sm:$0xff]
    %v232 = vld [vmem:[%s1 + $0x600] sm:$0xff]
    %v233 = vld [vmem:[%s1 + $0x608] sm:$0xff]
    %v234 = vld [vmem:[%s1 + $0x610] sm:$0xff]
    %v235 = vld [vmem:[%s1 + $0x618] sm:$0xff]
    %v236 = vld [vmem:[%s1 + $0x620] sm:$0xff]
    %v237 = vld [vmem:[%s1 + $0x628] sm:$0xff]
    %v238 = vld [vmem:[%s1 + $0x630] sm:$0xff]
    %v239 = vld [vmem:[%s1 + $0x638] sm:$0xff]
    %v240 = vld [vmem:[%s1 + $0x640] sm:$0xff]
    %v241 = vld [vmem:[%s1 + $0x648] sm:$0xff]
    %v242 = vld [vmem:[%s1 + $0x650] sm:$0xff]
    %v243 = vld [vmem:[%s1 + $0x658] sm:$0xff]
    %v244 = vld [vmem:[%s1 + $0x660] sm:$0xff]
    %v245 = vld [vmem:[%s1 + $0x668] sm:$0xff]
    %v246 = vld [vmem:[%s1 + $0x670] sm:$0xff]
    %v247 = vld [vmem:[%s1 + $0x678] sm:$0xff]
    %v248 = vld [vmem:[%s1 + $0x680] sm:$0xff]
    %v249 = vld [vmem:[%s1 + $0x688] sm:$0xff]
    %v250 = vld [vmem:[%s1 + $0x690] sm:$0xff]
    %v251 = vld [vmem:[%s1 + $0x698] sm:$0xff]
    %v252 = vld [vmem:[%s1 + $0x6a0] sm:$0xff]
    %v253 = vld [vmem:[%s1 + $0x6a8] sm:$0xff]
    %v254 = vld [vmem:[%s1 + $0x6b0] sm:$0xff]
    %v255 = vld [vmem:[%s1 + $0x6b8] sm:$0xff]
    %v256 = vld [vmem:[%s1 + $0x6c0] sm:$0xff]
    %v257 = vld [vmem:[%s1 + $0x6c8] sm:$0xff]
    %v258 = vld [vmem:[%s1 + $0x6d0] sm:$0xff]
    %v259 = vld [vmem:[%s1 + $0x6d8] sm:$0xff]
    %v260 = vld [vmem:[%s1 + $0x6e0] sm:$0xff]
    %v261 = vld [vmem:[%s1 + $0x6e8] sm:$0xff]
    %v262 = vld [vmem:[%s1 + $0x6f0] sm:$0xff]
    %v263 = vld [vmem:[%s1 + $0x6f8] sm:$0xff]
    %v264 = vld [vmem:[%s1 + $0x700] sm:$0xff]
    %v265 = vld [vmem:[%s1 + $0x708] sm:$0xff]
    %v266 = vld [vmem:[%s1 + $0x710] sm:$0xff]
    %v267 = vld [vmem:[%s1 + $0x718] sm:$0xff]
    %v268 = vld [vmem:[%s1 + $0x720] sm:$0xff]
    %v269 = vld [vmem:[%s1 + $0x728] sm:$0xff]
    %v270 = vld [vmem:[%s1 + $0x730] sm:$0xff]
    %v271 = vld [vmem:[%s1 + $0x738] sm:$0xff]
    %v272 = vld [vmem:[%s1 + $0x740] sm:$0xff]
    %v273 = vld [vmem:[%s1 + $0x748] sm:$0xff]
    %v274 = vld [vmem:[%s1 + $0x750] sm:$0xff]
    %v275 = vld [vmem:[%s1 + $0x758] sm:$0xff]
    %v276 = vld [vmem:[%s1 + $0x760] sm:$0xff]
    %v277 = vld [vmem:[%s1 + $0x768] sm:$0xff]
    %v278 = vld [vmem:[%s1 + $0x770] sm:$0xff]
    %v279 = vld [vmem:[%s1 + $0x778] sm:$0xff]
    %v280 = vld [vmem:[%s1 + $0x780] sm:$0xff]
    %v281 = vld [vmem:[%s1 + $0x788] sm:$0xff]
    %v282 = vld [vmem:[%s1 + $0x790] sm:$0xff]
    %v283 = vld [vmem:[%s1 + $0x798] sm:$0xff]
    %v284 = vld [vmem:[%s1 + $0x7a0] sm:$0xff]
    %v285 = vld [vmem:[%s1 + $0x7a8] sm:$0xff]
    %v286 = vld [vmem:[%s1 + $0x7b0] sm:$0xff]
    %v287 = vld [vmem:[%s1 + $0x7b8] sm:$0xff]
    %v288 = vld [vmem:[%s1 + $0x7c0] sm:$0xff]
    %v289 = vld [vmem:[%s1 + $0x7c8] sm:$0xff]
    %v290 = vld [vmem:[%s1 + $0x7d0] sm:$0xff]
    %v291 = vld [vmem:[%s1 + $0x7d8] sm:$0xff]
    %v292 = vld [vmem:[%s1 + $0x7e0] sm:$0xff]
    %v293 = vld [vmem:[%s1 + $0x7e8] sm:$0xff]
    %v294 = vld [vmem:[%s1 + $0x7f0] sm:$0xff]
    %v295 = vld [vmem:[%s1 + $0x7f8] sm:$0xff]
    %296 = vmatprep.subr.mxu0 0.0
    %297 = vmatpush1.msra.mxu0 %v40
    %298 = vmatprep.subr.mxu0 0.0
    %299 = vmatpush1.msra.mxu0 %v41
    %300 = vmatprep.subr.mxu0 0.0
    %301 = vmatpush1.msra.mxu0 %v42
    %302 = vmatprep.subr.mxu0 0.0
    %303 = vmatpush1.msra.mxu0 %v43
    %304 = vmatprep.subr.mxu0 0.0
    %305 = vmatpush1.msra.mxu0 %v44
    %306 = vmatprep.subr.mxu0 0.0
    %307 = vmatpush1.msra.mxu0 %v45
    %308 = vmatprep.subr.mxu0 0.0
    %309 = vmatpush1.msra.mxu0 %v46
    %310 = vmatprep.subr.mxu0 0.0
    %311 = vmatpush1.msra.mxu0 %v47
    %312 = vmatprep.subr.mxu0 0.0
    %313 = vmatpush1.msra.mxu0 %v48
    %314 = vmatprep.subr.mxu0 0.0
    %315 = vmatpush1.msra.mxu0 %v49
    %316 = vmatprep.subr.mxu0 0.0
    %317 = vmatpush1.msra.mxu0 %v50
    %318 = vmatprep.subr.mxu0 0.0
    %319 = vmatpush1.msra.mxu0 %v51
    %320 = vmatprep.subr.mxu0 0.0
    %321 = vmatpush1.msra.mxu0 %v52
    %322 = vmatprep.subr.mxu0 0.0
    %323 = vmatpush1.msra.mxu0 %v53
    %324 = vmatprep.subr.mxu0 0.0
    %325 = vmatpush1.msra.mxu0 %v54
    %326 = vmatprep.subr.mxu0 0.0
    %327 = vmatpush1.msra.mxu0 %v55
    %328 = vmatprep.subr.mxu0 0.0
    %329 = vmatpush1.msra.mxu0 %v56
    %330 = vmatprep.subr.mxu0 0.0
    %331 = vmatpush1.msra.mxu0 %v57
    %332 = vmatprep.subr.mxu0 0.0
    %333 = vmatpush1.msra.mxu0 %v58
    %334 = vmatprep.subr.mxu0 0.0
    %335 = vmatpush1.msra.mxu0 %v59
    %336 = vmatprep.subr.mxu0 0.0
    %337 = vmatpush1.msra.mxu0 %v60
    %338 = vmatprep.subr.mxu0 0.0
    %339 = vmatpush1.msra.mxu0 %v61
    %340 = vmatprep.subr.mxu0 0.0
    %341 = vmatpush1.msra.mxu0 %v62
    %342 = vmatprep.subr.mxu0 0.0
    %343 = vmatpush1.msra.mxu0 %v63
    %344 = vmatprep.subr.mxu0 0.0
    %345 = vmatpush1.msra.mxu0 %v64
    %346 = vmatprep.subr.mxu0 0.0
    %347 = vmatpush1.msra.mxu0 %v65
    %348 = vmatprep.subr.mxu0 0.0
    %349 = vmatpush1.msra.mxu0 %v66
    %350 = vmatprep.subr.mxu0 0.0
    %351 = vmatpush1.msra.mxu0 %v67
    %352 = vmatprep.subr.mxu0 0.0
    %353 = vmatpush1.msra.mxu0 %v68
    %354 = vmatprep.subr.mxu0 0.0
    %355 = vmatpush1.msra.mxu0 %v69
    %356 = vmatprep.subr.mxu0 0.0
    %357 = vmatpush1.msra.mxu0 %v70
    %358 = vmatprep.subr.mxu0 0.0
    %359 = vmatpush1.msra.mxu0 %v71
    %360 = vmatprep.mubr.f32.mxu0 %v25
    %361 = vmatmul.mubr.f32.gmra.mrb[0].mxu0 %v24
    %v362 = vpop.f32.mrb[0].mxu0
    %v363 = vadd.f32 0.0, %v362
    %v364 = vpop.f32.mrb[0].mxu0
    %365 = vdwg.mxu0
    %366 = vmatprep.subr.mxu0 0.0
    %367 = vmatpush1.msra.mxu0 %v72
    %368 = vmatprep.subr.mxu0 0.0
    %369 = vmatpush1.msra.mxu0 %v73
    %370 = vmatprep.subr.mxu0 0.0
    %371 = vmatpush1.msra.mxu0 %v74
    %372 = vmatprep.subr.mxu0 0.0
    %373 = vmatpush1.msra.mxu0 %v75
    %374 = vmatprep.subr.mxu0 0.0
    %375 = vmatpush1.msra.mxu0 %v76
    %376 = vmatprep.subr.mxu0 0.0
    %377 = vmatpush1.msra.mxu0 %v77
    %378 = vmatprep.subr.mxu0 0.0
    %379 = vmatpush1.msra.mxu0 %v78
    %380 = vmatprep.subr.mxu0 0.0
    %381 = vmatpush1.msra.mxu0 %v79
    %382 = vmatprep.subr.mxu0 0.0
    %383 = vmatpush1.msra.mxu0 %v80
    %384 = vmatprep.subr.mxu0 0.0
    %385 = vmatpush1.msra.mxu0 %v81
    %386 = vmatprep.subr.mxu0 0.0
    %387 = vmatpush1.msra.mxu0 %v82
    %388 = vmatprep.subr.mxu0 0.0
    %389 = vmatpush1.msra.mxu0 %v83
    %390 = vmatprep.subr.mxu0 0.0
    %391 = vmatpush1.msra.mxu0 %v84
    %392 = vmatprep.subr.mxu0 0.0
    %393 = vmatpush1.msra.mxu0 %v85
    %394 = vmatprep.subr.mxu0 0.0
    %395 = vmatpush1.msra.mxu0 %v86
    %396 = vmatprep.subr.mxu0 0.0
    %397 = vmatpush1.msra.mxu0 %v87
    %398 = vmatprep.subr.mxu0 0.0
    %399 = vmatpush1.msra.mxu0 %v88
    %400 = vmatprep.subr.mxu0 0.0
    %401 = vmatpush1.msra.mxu0 %v89
    %402 = vmatprep.subr.mxu0 0.0
    %403 = vmatpush1.msra.mxu0 %v90
    %404 = vmatprep.subr.mxu0 0.0
    %405 = vmatpush1.msra.mxu0 %v91
    %406 = vmatprep.subr.mxu0 0.0
    %407 = vmatpush1.msra.mxu0 %v92
    %408 = vmatprep.subr.mxu0 0.0
    %409 = vmatpush1.msra.mxu0 %v93
    %410 = vmatprep.subr.mxu0 0.0
    %411 = vmatpush1.msra.mxu0 %v94
    %412 = vmatprep.subr.mxu0 0.0
    %413 = vmatpush1.msra.mxu0 %v95
    %414 = vmatprep.subr.mxu0 0.0
    %415 = vmatpush1.msra.mxu0 %v96
    %416 = vmatprep.subr.mxu0 0.0
    %417 = vmatpush1.msra.mxu0 %v97
    %418 = vmatprep.subr.mxu0 0.0
    %419 = vmatpush1.msra.mxu0 %v98
    %420 = vmatprep.subr.mxu0 0.0
    %421 = vmatpush1.msra.mxu0 %v99
    %422 = vmatprep.subr.mxu0 0.0
    %423 = vmatpush1.msra.mxu0 %v100
    %424 = vmatprep.subr.mxu0 0.0
    %425 = vmatpush1.msra.mxu0 %v101
    %426 = vmatprep.subr.mxu0 0.0
    %427 = vmatpush1.msra.mxu0 %v102
    %428 = vmatprep.subr.mxu0 0.0
    %429 = vmatpush1.msra.mxu0 %v103
    %430 = vmatprep.mubr.f32.mxu0 %v27
    %431 = vmatmul.mubr.f32.gmra.mrb[0].mxu0 %v26
    %v432 = vpop.f32.mrb[0].mxu0
    %v433 = vadd.f32 %v363, %v432
    %v434 = vpop.f32.mrb[0].mxu0
    %435 = vdwg.mxu0
    %436 = vmatprep.subr.mxu0 0.0
    %437 = vmatpush1.msra.mxu0 %v104
    %438 = vmatprep.subr.mxu0 0.0
    %439 = vmatpush1.msra.mxu0 %v105
    %440 = vmatprep.subr.mxu0 0.0
    %441 = vmatpush1.msra.mxu0 %v106
    %442 = vmatprep.subr.mxu0 0.0
    %443 = vmatpush1.msra.mxu0 %v107
    %444 = vmatprep.subr.mxu0 0.0
    %445 = vmatpush1.msra.mxu0 %v108
    %446 = vmatprep.subr.mxu0 0.0
    %447 = vmatpush1.msra.mxu0 %v109
    %448 = vmatprep.subr.mxu0 0.0
    %449 = vmatpush1.msra.mxu0 %v110
    %450 = vmatprep.subr.mxu0 0.0
    %451 = vmatpush1.msra.mxu0 %v111
    %452 = vmatprep.subr.mxu0 0.0
    %453 = vmatpush1.msra.mxu0 %v112
    %454 = vmatprep.subr.mxu0 0.0
    %455 = vmatpush1.msra.mxu0 %v113
    %456 = vmatprep.subr.mxu0 0.0
    %457 = vmatpush1.msra.mxu0 %v114
    %458 = vmatprep.subr.mxu0 0.0
    %459 = vmatpush1.msra.mxu0 %v115
    %460 = vmatprep.subr.mxu0 0.0
    %461 = vmatpush1.msra.mxu0 %v116
    %462 = vmatprep.subr.mxu0 0.0
    %463 = vmatpush1.msra.mxu0 %v117
    %464 = vmatprep.subr.mxu0 0.0
    %465 = vmatpush1.msra.mxu0 %v118
    %466 = vmatprep.subr.mxu0 0.0
    %467 = vmatpush1.msra.mxu0 %v119
    %468 = vmatprep.subr.mxu0 0.0
    %469 = vmatpush1.msra.mxu0 %v120
    %470 = vmatprep.subr.mxu0 0.0
    %471 = vmatpush1.msra.mxu0 %v121
    %472 = vmatprep.subr.mxu0 0.0
    %473 = vmatpush1.msra.mxu0 %v122
    %474 = vmatprep.subr.mxu0 0.0
    %475 = vmatpush1.msra.mxu0 %v123
    %476 = vmatprep.subr.mxu0 0.0
    %477 = vmatpush1.msra.mxu0 %v124
    %478 = vmatprep.subr.mxu0 0.0
    %479 = vmatpush1.msra.mxu0 %v125
    %480 = vmatprep.subr.mxu0 0.0
    %481 = vmatpush1.msra.mxu0 %v126
    %482 = vmatprep.subr.mxu0 0.0
    %483 = vmatpush1.msra.mxu0 %v127
    %484 = vmatprep.subr.mxu0 0.0
    %485 = vmatpush1.msra.mxu0 %v128
    %486 = vmatprep.subr.mxu0 0.0
    %487 = vmatpush1.msra.mxu0 %v129
    %488 = vmatprep.subr.mxu0 0.0
    %489 = vmatpush1.msra.mxu0 %v130
    %490 = vmatprep.subr.mxu0 0.0
    %491 = vmatpush1.msra.mxu0 %v131
    %492 = vmatprep.subr.mxu0 0.0
    %493 = vmatpush1.msra.mxu0 %v132
    %494 = vmatprep.subr.mxu0 0.0
    %495 = vmatpush1.msra.mxu0 %v133
    %496 = vmatprep.subr.mxu0 0.0
    %497 = vmatpush1.msra.mxu0 %v134
    %498 = vmatprep.subr.mxu0 0.0
    %499 = vmatpush1.msra.mxu0 %v135
    %500 = vmatprep.mubr.f32.mxu0 %v29
    %501 = vmatmul.mubr.f32.gmra.mrb[0].mxu0 %v28
    %v502 = vpop.f32.mrb[0].mxu0
    %v503 = vadd.f32 0.0, %v502
    %v504 = vpop.f32.mrb[0].mxu0
    %505 = vdwg.mxu0
    %506 = vmatprep.subr.mxu0 0.0
    %507 = vmatpush1.msra.mxu0 %v136
    %508 = vmatprep.subr.mxu0 0.0
    %509 = vmatpush1.msra.mxu0 %v137
    %510 = vmatprep.subr.mxu0 0.0
    %511 = vmatpush1.msra.mxu0 %v138
    %512 = vmatprep.subr.mxu0 0.0
    %513 = vmatpush1.msra.mxu0 %v139
    %514 = vmatprep.subr.mxu0 0.0
    %515 = vmatpush1.msra.mxu0 %v140
    %516 = vmatprep.subr.mxu0 0.0
    %517 = vmatpush1.msra.mxu0 %v141
    %518 = vmatprep.subr.mxu0 0.0
    %519 = vmatpush1.msra.mxu0 %v142
    %520 = vmatprep.subr.mxu0 0.0
    %521 = vmatpush1.msra.mxu0 %v143
    %522 = vmatprep.subr.mxu0 0.0
    %523 = vmatpush1.msra.mxu0 %v144
    %524 = vmatprep.subr.mxu0 0.0
    %525 = vmatpush1.msra.mxu0 %v145
    %526 = vmatprep.subr.mxu0 0.0
    %527 = vmatpush1.msra.mxu0 %v146
    %528 = vmatprep.subr.mxu0 0.0
    %529 = vmatpush1.msra.mxu0 %v147
    %530 = vmatprep.subr.mxu0 0.0
    %531 = vmatpush1.msra.mxu0 %v148
    %532 = vmatprep.subr.mxu0 0.0
    %533 = vmatpush1.msra.mxu0 %v149
    %534 = vmatprep.subr.mxu0 0.0
    %535 = vmatpush1.msra.mxu0 %v150
    %536 = vmatprep.subr.mxu0 0.0
    %537 = vmatpush1.msra.mxu0 %v151
    %538 = vmatprep.subr.mxu0 0.0
    %539 = vmatpush1.msra.mxu0 %v152
    %540 = vmatprep.subr.mxu0 0.0
    %541 = vmatpush1.msra.mxu0 %v153
    %542 = vmatprep.subr.mxu0 0.0
    %543 = vmatpush1.msra.mxu0 %v154
    %544 = vmatprep.subr.mxu0 0.0
    %545 = vmatpush1.msra.mxu0 %v155
    %546 = vmatprep.subr.mxu0 0.0
    %547 = vmatpush1.msra.mxu0 %v156
    %548 = vmatprep.subr.mxu0 0.0
    %549 = vmatpush1.msra.mxu0 %v157
    %550 = vmatprep.subr.mxu0 0.0
    %551 = vmatpush1.msra.mxu0 %v158
    %552 = vmatprep.subr.mxu0 0.0
    %553 = vmatpush1.msra.mxu0 %v159
    %554 = vmatprep.subr.mxu0 0.0
    %555 = vmatpush1.msra.mxu0 %v160
    %556 = vmatprep.subr.mxu0 0.0
    %557 = vmatpush1.msra.mxu0 %v161
    %558 = vmatprep.subr.mxu0 0.0
    %559 = vmatpush1.msra.mxu0 %v162
    %560 = vmatprep.subr.mxu0 0.0
    %561 = vmatpush1.msra.mxu0 %v163
    %562 = vmatprep.subr.mxu0 0.0
    %563 = vmatpush1.msra.mxu0 %v164
    %564 = vmatprep.subr.mxu0 0.0
    %565 = vmatpush1.msra.mxu0 %v165
    %566 = vmatprep.subr.mxu0 0.0
    %567 = vmatpush1.msra.mxu0 %v166
    %568 = vmatprep.subr.mxu0 0.0
    %569 = vmatpush1.msra.mxu0 %v167
    %570 = vmatprep.mubr.f32.mxu0 %v31
    %571 = vmatmul.mubr.f32.gmra.mrb[0].mxu0 %v30
    %v572 = vpop.f32.mrb[0].mxu0
    %v573 = vadd.f32 %v503, %v572
    %v574 = vpop.f32.mrb[0].mxu0
    %575 = vdwg.mxu0
    %576 = vmatprep.subr.mxu0 0.0
    %577 = vmatpush1.msra.mxu0 %v168
    %578 = vmatprep.subr.mxu0 0.0
    %579 = vmatpush1.msra.mxu0 %v169
    %580 = vmatprep.subr.mxu0 0.0
    %581 = vmatpush1.msra.mxu0 %v170
    %582 = vmatprep.subr.mxu0 0.0
    %583 = vmatpush1.msra.mxu0 %v171
    %584 = vmatprep.subr.mxu0 0.0
    %585 = vmatpush1.msra.mxu0 %v172
    %586 = vmatprep.subr.mxu0 0.0
    %587 = vmatpush1.msra.mxu0 %v173
    %588 = vmatprep.subr.mxu0 0.0
    %589 = vmatpush1.msra.mxu0 %v174
    %590 = vmatprep.subr.mxu0 0.0
    %591 = vmatpush1.msra.mxu0 %v175
    %592 = vmatprep.subr.mxu0 0.0
    %593 = vmatpush1.msra.mxu0 %v176
    %594 = vmatprep.subr.mxu0 0.0
    %595 = vmatpush1.msra.mxu0 %v177
    %596 = vmatprep.subr.mxu0 0.0
    %597 = vmatpush1.msra.mxu0 %v178
    %598 = vmatprep.subr.mxu0 0.0
    %599 = vmatpush1.msra.mxu0 %v179
    %600 = vmatprep.subr.mxu0 0.0
    %601 = vmatpush1.msra.mxu0 %v180
    %602 = vmatprep.subr.mxu0 0.0
    %603 = vmatpush1.msra.mxu0 %v181
    %604 = vmatprep.subr.mxu0 0.0
    %605 = vmatpush1.msra.mxu0 %v182
    %606 = vmatprep.subr.mxu0 0.0
    %607 = vmatpush1.msra.mxu0 %v183
    %608 = vmatprep.subr.mxu0 0.0
    %609 = vmatpush1.msra.mxu0 %v184
    %610 = vmatprep.subr.mxu0 0.0
    %611 = vmatpush1.msra.mxu0 %v185
    %612 = vmatprep.subr.mxu0 0.0
    %613 = vmatpush1.msra.mxu0 %v186
    %614 = vmatprep.subr.mxu0 0.0
    %615 = vmatpush1.msra.mxu0 %v187
    %616 = vmatprep.subr.mxu0 0.0
    %617 = vmatpush1.msra.mxu0 %v188
    %618 = vmatprep.subr.mxu0 0.0
    %619 = vmatpush1.msra.mxu0 %v189
    %620 = vmatprep.subr.mxu0 0.0
    %621 = vmatpush1.msra.mxu0 %v190
    %622 = vmatprep.subr.mxu0 0.0
    %623 = vmatpush1.msra.mxu0 %v191
    %624 = vmatprep.subr.mxu0 0.0
    %625 = vmatpush1.msra.mxu0 %v192
    %626 = vmatprep.subr.mxu0 0.0
    %627 = vmatpush1.msra.mxu0 %v193
    %628 = vmatprep.subr.mxu0 0.0
    %629 = vmatpush1.msra.mxu0 %v194
    %630 = vmatprep.subr.mxu0 0.0
    %631 = vmatpush1.msra.mxu0 %v195
    %632 = vmatprep.subr.mxu0 0.0
    %633 = vmatpush1.msra.mxu0 %v196
    %634 = vmatprep.subr.mxu0 0.0
    %635 = vmatpush1.msra.mxu0 %v197
    %636 = vmatprep.subr.mxu0 0.0
    %637 = vmatpush1.msra.mxu0 %v198
    %638 = vmatprep.subr.mxu0 0.0
    %639 = vmatpush1.msra.mxu0 %v199
    %640 = vmatprep.mubr.f32.mxu0 %v33
    %641 = vmatmul.mubr.f32.gmra.mrb[0].mxu0 %v32
    %v642 = vpop.f32.mrb[0].mxu0
    %v643 = vadd.f32 0.0, %v642
    %v644 = vpop.f32.mrb[0].mxu0
    %645 = vdwg.mxu0
    %646 = vmatprep.subr.mxu0 0.0
    %647 = vmatpush1.msra.mxu0 %v200
    %648 = vmatprep.subr.mxu0 0.0
    %649 = vmatpush1.msra.mxu0 %v201
    %650 = vmatprep.subr.mxu0 0.0
    %651 = vmatpush1.msra.mxu0 %v202
    %652 = vmatprep.subr.mxu0 0.0
    %653 = vmatpush1.msra.mxu0 %v203
    %654 = vmatprep.subr.mxu0 0.0
    %655 = vmatpush1.msra.mxu0 %v204
    %656 = vmatprep.subr.mxu0 0.0
    %657 = vmatpush1.msra.mxu0 %v205
    %658 = vmatprep.subr.mxu0 0.0
    %659 = vmatpush1.msra.mxu0 %v206
    %660 = vmatprep.subr.mxu0 0.0
    %661 = vmatpush1.msra.mxu0 %v207
    %662 = vmatprep.subr.mxu0 0.0
    %663 = vmatpush1.msra.mxu0 %v208
    %664 = vmatprep.subr.mxu0 0.0
    %665 = vmatpush1.msra.mxu0 %v209
    %666 = vmatprep.subr.mxu0 0.0
    %667 = vmatpush1.msra.mxu0 %v210
    %668 = vmatprep.subr.mxu0 0.0
    %669 = vmatpush1.msra.mxu0 %v211
    %670 = vmatprep.subr.mxu0 0.0
    %671 = vmatpush1.msra.mxu0 %v212
    %672 = vmatprep.subr.mxu0 0.0
    %673 = vmatpush1.msra.mxu0 %v213
    %674 = vmatprep.subr.mxu0 0.0
    %675 = vmatpush1.msra.mxu0 %v214
    %676 = vmatprep.subr.mxu0 0.0
    %677 = vmatpush1.msra.mxu0 %v215
    %678 = vmatprep.subr.mxu0 0.0
    %679 = vmatpush1.msra.mxu0 %v216
    %680 = vmatprep.subr.mxu0 0.0
    %681 = vmatpush1.msra.mxu0 %v217
    %682 = vmatprep.subr.mxu0 0.0
    %683 = vmatpush1.msra.mxu0 %v218
    %684 = vmatprep.subr.mxu0 0.0
    %685 = vmatpush1.msra.mxu0 %v219
    %686 = vmatprep.subr.mxu0 0.0
    %687 = vmatpush1.msra.mxu0 %v220
    %688 = vmatprep.subr.mxu0 0.0
    %689 = vmatpush1.msra.mxu0 %v221
    %690 = vmatprep.subr.mxu0 0.0
    %691 = vmatpush1.msra.mxu0 %v222
    %692 = vmatprep.subr.mxu0 0.0
    %693 = vmatpush1.msra.mxu0 %v223
    %694 = vmatprep.subr.mxu0 0.0
    %695 = vmatpush1.msra.mxu0 %v224
    %696 = vmatprep.subr.mxu0 0.0
    %697 = vmatpush1.msra.mxu0 %v225
    %698 = vmatprep.subr.mxu0 0.0
    %699 = vmatpush1.msra.mxu0 %v226
    %700 = vmatprep.subr.mxu0 0.0
    %701 = vmatpush1.msra.mxu0 %v227
    %702 = vmatprep.subr.mxu0 0.0
    %703 = vmatpush1.msra.mxu0 %v228
    %704 = vmatprep.subr.mxu0 0.0
    %705 = vmatpush1.msra.mxu0 %v229
    %706 = vmatprep.subr.mxu0 0.0
    %707 = vmatpush1.msra.mxu0 %v230
    %708 = vmatprep.subr.mxu0 0.0
    %709 = vmatpush1.msra.mxu0 %v231
    %710 = vmatprep.mubr.f32.mxu0 %v35
    %711 = vmatmul.mubr.f32.gmra.mrb[0].mxu0 %v34
    %v712 = vpop.f32.mrb[0].mxu0
    %v713 = vadd.f32 %v643, %v712
    %v714 = vpop.f32.mrb[0].mxu0
    %715 = vdwg.mxu0
    %716 = vmatprep.subr.mxu0 0.0
    %717 = vmatpush1.msra.mxu0 %v232
    %718 = vmatprep.subr.mxu0 0.0
    %719 = vmatpush1.msra.mxu0 %v233
    %720 = vmatprep.subr.mxu0 0.0
    %721 = vmatpush1.msra.mxu0 %v234
    %722 = vmatprep.subr.mxu0 0.0
    %723 = vmatpush1.msra.mxu0 %v235
    %724 = vmatprep.subr.mxu0 0.0
    %725 = vmatpush1.msra.mxu0 %v236
    %726 = vmatprep.subr.mxu0 0.0
    %727 = vmatpush1.msra.mxu0 %v237
    %728 = vmatprep.subr.mxu0 0.0
    %729 = vmatpush1.msra.mxu0 %v238
    %730 = vmatprep.subr.mxu0 0.0
    %731 = vmatpush1.msra.mxu0 %v239
    %732 = vmatprep.subr.mxu0 0.0
    %733 = vmatpush1.msra.mxu0 %v240
    %734 = vmatprep.subr.mxu0 0.0
    %735 = vmatpush1.msra.mxu0 %v241
    %736 = vmatprep.subr.mxu0 0.0
    %737 = vmatpush1.msra.mxu0 %v242
    %738 = vmatprep.subr.mxu0 0.0
    %739 = vmatpush1.msra.mxu0 %v243
    %740 = vmatprep.subr.mxu0 0.0
    %741 = vmatpush1.msra.mxu0 %v244
    %742 = vmatprep.subr.mxu0 0.0
    %743 = vmatpush1.msra.mxu0 %v245
    %744 = vmatprep.subr.mxu0 0.0
    %745 = vmatpush1.msra.mxu0 %v246
    %746 = vmatprep.subr.mxu0 0.0
    %747 = vmatpush1.msra.mxu0 %v247
    %748 = vmatprep.subr.mxu0 0.0
    %749 = vmatpush1.msra.mxu0 %v248
    %750 = vmatprep.subr.mxu0 0.0
    %751 = vmatpush1.msra.mxu0 %v249
    %752 = vmatprep.subr.mxu0 0.0
    %753 = vmatpush1.msra.mxu0 %v250
    %754 = vmatprep.subr.mxu0 0.0
    %755 = vmatpush1.msra.mxu0 %v251
    %756 = vmatprep.subr.mxu0 0.0
    %757 = vmatpush1.msra.mxu0 %v252
    %758 = vmatprep.subr.mxu0 0.0
    %759 = vmatpush1.msra.mxu0 %v253
    %760 = vmatprep.subr.mxu0 0.0
    %761 = vmatpush1.msra.mxu0 %v254
    %762 = vmatprep.subr.mxu0 0.0
    %763 = vmatpush1.msra.mxu0 %v255
    %764 = vmatprep.subr.mxu0 0.0
    %765 = vmatpush1.msra.mxu0 %v256
    %766 = vmatprep.subr.mxu0 0.0
    %767 = vmatpush1.msra.mxu0 %v257
    %768 = vmatprep.subr.mxu0 0.0
    %769 = vmatpush1.msra.mxu0 %v258
    %770 = vmatprep.subr.mxu0 0.0
    %771 = vmatpush1.msra.mxu0 %v259
    %772 = vmatprep.subr.mxu0 0.0
    %773 = vmatpush1.msra.mxu0 %v260
    %774 = vmatprep.subr.mxu0 0.0
    %775 = vmatpush1.msra.mxu0 %v261
    %776 = vmatprep.subr.mxu0 0.0
    %777 = vmatpush1.msra.mxu0 %v262
    %778 = vmatprep.subr.mxu0 0.0
    %779 = vmatpush1.msra.mxu0 %v263
    %780 = vmatprep.mubr.f32.mxu0 %v37
    %781 = vmatmul.mubr.f32.gmra.mrb[0].mxu0 %v36
    %v782 = vpop.f32.mrb[0].mxu0
    %v783 = vadd.f32 0.0, %v782
    %v784 = vpop.f32.mrb[0].mxu0
    %785 = vdwg.mxu0
    %786 = vmatprep.subr.mxu0 0.0
    %787 = vmatpush1.msra.mxu0 %v264
    %788 = vmatprep.subr.mxu0 0.0
    %789 = vmatpush1.msra.mxu0 %v265
    %790 = vmatprep.subr.mxu0 0.0
    %791 = vmatpush1.msra.mxu0 %v266
    %792 = vmatprep.subr.mxu0 0.0
    %793 = vmatpush1.msra.mxu0 %v267
    %794 = vmatprep.subr.mxu0 0.0
    %795 = vmatpush1.msra.mxu0 %v268
    %796 = vmatprep.subr.mxu0 0.0
    %797 = vmatpush1.msra.mxu0 %v269
    %798 = vmatprep.subr.mxu0 0.0
    %799 = vmatpush1.msra.mxu0 %v270
    %800 = vmatprep.subr.mxu0 0.0
    %801 = vmatpush1.msra.mxu0 %v271
    %802 = vmatprep.subr.mxu0 0.0
    %803 = vmatpush1.msra.mxu0 %v272
    %804 = vmatprep.subr.mxu0 0.0
    %805 = vmatpush1.msra.mxu0 %v273
    %806 = vmatprep.subr.mxu0 0.0
    %807 = vmatpush1.msra.mxu0 %v274
    %808 = vmatprep.subr.mxu0 0.0
    %809 = vmatpush1.msra.mxu0 %v275
    %810 = vmatprep.subr.mxu0 0.0
    %811 = vmatpush1.msra.mxu0 %v276
    %812 = vmatprep.subr.mxu0 0.0
    %813 = vmatpush1.msra.mxu0 %v277
    %814 = vmatprep.subr.mxu0 0.0
    %815 = vmatpush1.msra.mxu0 %v278
    %816 = vmatprep.subr.mxu0 0.0
    %817 = vmatpush1.msra.mxu0 %v279
    %818 = vmatprep.subr.mxu0 0.0
    %819 = vmatpush1.msra.mxu0 %v280
    %820 = vmatprep.subr.mxu0 0.0
    %821 = vmatpush1.msra.mxu0 %v281
    %822 = vmatprep.subr.mxu0 0.0
    %823 = vmatpush1.msra.mxu0 %v282
    %824 = vmatprep.subr.mxu0 0.0
    %825 = vmatpush1.msra.mxu0 %v283
    %826 = vmatprep.subr.mxu0 0.0
    %827 = vmatpush1.msra.mxu0 %v284
    %828 = vmatprep.subr.mxu0 0.0
    %829 = vmatpush1.msra.mxu0 %v285
    %830 = vmatprep.subr.mxu0 0.0
    %831 = vmatpush1.msra.mxu0 %v286
    %832 = vmatprep.subr.mxu0 0.0
    %833 = vmatpush1.msra.mxu0 %v287
    %834 = vmatprep.subr.mxu0 0.0
    %835 = vmatpush1.msra.mxu0 %v288
    %836 = vmatprep.subr.mxu0 0.0
    %837 = vmatpush1.msra.mxu0 %v289
    %838 = vmatprep.subr.mxu0 0.0
    %839 = vmatpush1.msra.mxu0 %v290
    %840 = vmatprep.subr.mxu0 0.0
    %841 = vmatpush1.msra.mxu0 %v291
    %842 = vmatprep.subr.mxu0 0.0
    %843 = vmatpush1.msra.mxu0 %v292
    %844 = vmatprep.subr.mxu0 0.0
    %845 = vmatpush1.msra.mxu0 %v293
    %846 = vmatprep.subr.mxu0 0.0
    %847 = vmatpush1.msra.mxu0 %v294
    %848 = vmatprep.subr.mxu0 0.0
    %849 = vmatpush1.msra.mxu0 %v295
    %850 = vmatprep.mubr.f32.mxu0 %v39
    %851 = vmatmul.mubr.f32.gmra.mrb[0].mxu0 %v38
    %v852 = vpop.f32.mrb[0].mxu0
    %v853 = vadd.f32 %v783, %v852
    %v854 = vpop.f32.mrb[0].mxu0
    %855 = vdwg.mxu0
    %v856 = vld [vmem:[%s2] sm:$0x1]
    %v857 = vld [vmem:[%s2 + $0x1] sm:$0x1]
    %v858 = vld [vmem:[%s2 + $0x2] sm:$0x1]
    %v859 = vld [vmem:[%s2 + $0x3] sm:$0x1]
    %v864 = vlaneseq
    %v865 = vshrl.u32 %v864, 7
    %v866 = vsub.s32 0, %v865
    %v867 = vrot.slane %v856, %v866
    %v868 = vlaneseq
    %v869 = vshrl.u32 %v868, 7
    %v870 = vsub.s32 0, %v869
    %v871 = vrot.slane %v857, %v870
    %v872 = vlaneseq
    %v873 = vshrl.u32 %v872, 7
    %v874 = vsub.s32 0, %v873
    %v875 = vrot.slane %v858, %v874
    %v876 = vlaneseq
    %v877 = vshrl.u32 %v876, 7
    %v878 = vsub.s32 0, %v877
    %v879 = vrot.slane %v859, %v878
    %v884 = vadd.f32 %v433, %v867
    %v885 = vadd.f32 %v573, %v871
    %v886 = vadd.f32 %v713, %v875
    %v887 = vadd.f32 %v853, %v879
    %vm888 = vcmask 654848
    %v889 = vsel %vm888, %v433, 0.0
    %v890 = vsel %vm888, %v573, 0.0
    %v891 = vadd.f32 %v889, %v890
    %v892 = vsel %vm888, %v713, 0.0
    %v893 = vadd.f32 %v891, %v892
    %v894 = vsel %vm888, %v853, 0.0
    %v895 = vadd.f32 %v893, %v894
    %v896 = vld [vmem:[%s3] sm:$0x1]
    %v898 = vlaneseq
    %v899 = vshrl.u32 %v898, 7
    %v900 = vsub.s32 0, %v899
    %v901 = vrot.slane %v896, %v900
    %902 = vrot.lane.b32.xlu0 %v901, 64
    %v903 = vpop.permute.xlu0 %902
    %v905 = vadd.f32 %v895, %v903
    %907 = vrot.lane.b32.xlu0 %v905, 124
    %v908 = vpop.permute.xlu0 %907
    %v910 = vmax.f32 %v905, %v908
    %911 = vrot.lane.b32.xlu0 %v905, 120
    %v912 = vpop.permute.xlu0 %911
    %v914 = vmax.f32 %v910, %v912
    %915 = vrot.lane.b32.xlu0 %v905, 116
    %v916 = vpop.permute.xlu0 %915
    %v918 = vmax.f32 %v914, %v916
    %v919 = vsub.f32 %v905, %v918
    %v920 = vmul.f32 %v919, 1.442695
    %v921 = vpow.pop %v920
    %923 = vrot.lane.b32.xlu0 %v918, 4
    %v924 = vpop.permute.xlu0 %923
    %v926 = vsub.f32 %v905, %v924
    %v927 = vmul.f32 %v926, 1.442695
    %v928 = vpow.pop %v927
    %929 = vrot.lane.b32.xlu0 %v918, 8
    %v930 = vpop.permute.xlu0 %929
    %v932 = vsub.f32 %v905, %v930
    %v933 = vmul.f32 %v932, 1.442695
    %v934 = vpow.pop %v933
    %935 = vrot.lane.b32.xlu0 %v918, 12
    %v936 = vpop.permute.xlu0 %935
    %v938 = vsub.f32 %v905, %v936
    %v939 = vmul.f32 %v938, 1.442695
    %v940 = vpow.pop %v939
    %942 = vrot.lane.b32.xlu0 %v928, 124
    %v943 = vpop.permute.xlu0 %942
    %v945 = vadd.f32 %v921, %v943
    %947 = vrot.lane.b32.xlu0 %v934, 120
    %v948 = vpop.permute.xlu0 %947
    %v950 = vadd.f32 %v945, %v948
    %952 = vrot.lane.b32.xlu0 %v940, 116
    %v953 = vpop.permute.xlu0 %952
    %v955 = vadd.f32 %v950, %v953
    %v956 = vrcp.pop %v955
    %v957 = vmul.f32 1.0, %v956
    %v958 = vld [vmem:[%s5] sm:$0xf]
    %v959 = vmul.f32 %v921, %v957
    %961 = vrot.lane.b32.xlu0 %v959, 64
    %v962 = vpop.permute.xlu0 %961
    %vm963 = vcmask 31744
    %v964 = vsel %vm963, %v962, 0
    %vm966 = vcmask 1043456
    %v968 = vsel %vm966, %v958, 0
    %970 = vmatprep.subr.mxu0 0.0
    %971 = vmatpush1.msra.mxu0 %v968
    %972 = vmatprep.subr.mxu0 0.0
    %973 = vmatpush1.msra.mxu0 0.0
    %974 = vmatprep.subr.mxu0 0.0
    %975 = vmatpush1.msra.mxu0 0.0
    %976 = vmatprep.subr.mxu0 0.0
    %977 = vmatpush1.msra.mxu0 0.0
    %978 = vmatprep.subr.mxu0 0.0
    %979 = vmatpush1.msra.mxu0 0.0
    %980 = vmatprep.subr.mxu0 0.0
    %981 = vmatpush1.msra.mxu0 0.0
    %982 = vmatprep.subr.mxu0 0.0
    %983 = vmatpush1.msra.mxu0 0.0
    %984 = vmatprep.subr.mxu0 0.0
    %985 = vmatpush1.msra.mxu0 0.0
    %986 = vmatprep.subr.mxu0 0.0
    %987 = vmatpush1.msra.mxu0 0.0
    %988 = vmatprep.subr.mxu0 0.0
    %989 = vmatpush1.msra.mxu0 0.0
    %990 = vmatprep.subr.mxu0 0.0
    %991 = vmatpush1.msra.mxu0 0.0
    %992 = vmatprep.subr.mxu0 0.0
    %993 = vmatpush1.msra.mxu0 0.0
    %994 = vmatprep.subr.mxu0 0.0
    %995 = vmatpush1.msra.mxu0 0.0
    %996 = vmatprep.subr.mxu0 0.0
    %997 = vmatpush1.msra.mxu0 0.0
    %998 = vmatprep.subr.mxu0 0.0
    %999 = vmatpush1.msra.mxu0 0.0
    %1000 = vmatprep.subr.mxu0 0.0
    %1001 = vmatpush1.msra.mxu0 0.0
    %1002 = vmatprep.subr.mxu0 0.0
    %1003 = vmatpush1.msra.mxu0 0.0
    %1004 = vmatprep.subr.mxu0 0.0
    %1005 = vmatpush1.msra.mxu0 0.0
    %1006 = vmatprep.subr.mxu0 0.0
    %1007 = vmatpush1.msra.mxu0 0.0
    %1008 = vmatprep.subr.mxu0 0.0
    %1009 = vmatpush1.msra.mxu0 0.0
    %1010 = vmatprep.subr.mxu0 0.0
    %1011 = vmatpush1.msra.mxu0 0.0
    %1012 = vmatprep.subr.mxu0 0.0
    %1013 = vmatpush1.msra.mxu0 0.0
    %1014 = vmatprep.subr.mxu0 0.0
    %1015 = vmatpush1.msra.mxu0 0.0
    %1016 = vmatprep.subr.mxu0 0.0
    %1017 = vmatpush1.msra.mxu0 0.0
    %1018 = vmatprep.subr.mxu0 0.0
    %1019 = vmatpush1.msra.mxu0 0.0
    %1020 = vmatprep.subr.mxu0 0.0
    %1021 = vmatpush1.msra.mxu0 0.0
    %1022 = vmatprep.subr.mxu0 0.0
    %1023 = vmatpush1.msra.mxu0 0.0
    %1024 = vmatprep.subr.mxu0 0.0
    %1025 = vmatpush1.msra.mxu0 0.0
    %1026 = vmatprep.subr.mxu0 0.0
    %1027 = vmatpush1.msra.mxu0 0.0
    %1028 = vmatprep.subr.mxu0 0.0
    %1029 = vmatpush1.msra.mxu0 0.0
    %1030 = vmatprep.subr.mxu0 0.0
    %1031 = vmatpush1.msra.mxu0 0.0
    %1032 = vmatprep.subr.mxu0 0.0
    %1033 = vmatpush1.msra.mxu0 0.0
    %1034 = vmatprep.mubr.f32.mxu0 0.0
    %1035 = vmatmul.mubr.f32.gmra.mrb[0].mxu0 %v964
    %v1036 = vpop.f32.mrb[0].mxu0
    %v1037 = vadd.f32 0.0, %v1036
    %v1038 = vpop.f32.mrb[0].mxu0
    %1039 = vdwg.mxu0
    %v1040 = vmul.f32 %v1037, %v884
    %v1041 = vadd.f32 %v1040, 0.0
    %1043 = vrot.lane.b32.xlu0 %v957, 4
    %v1044 = vpop.permute.xlu0 %1043
    %v1046 = vmul.f32 %v928, %v1044
    %1048 = vrot.lane.b32.xlu0 %v1046, 60
    %v1049 = vpop.permute.xlu0 %1048
    %v1050 = vsel %vm963, %v1049, 0
    %1052 = vmatprep.subr.mxu0 0.0
    %1053 = vmatpush1.msra.mxu0 %v968
    %1054 = vmatprep.subr.mxu0 0.0
    %1055 = vmatpush1.msra.mxu0 0.0
    %1056 = vmatprep.subr.mxu0 0.0
    %1057 = vmatpush1.msra.mxu0 0.0
    %1058 = vmatprep.subr.mxu0 0.0
    %1059 = vmatpush1.msra.mxu0 0.0
    %1060 = vmatprep.subr.mxu0 0.0
    %1061 = vmatpush1.msra.mxu0 0.0
    %1062 = vmatprep.subr.mxu0 0.0
    %1063 = vmatpush1.msra.mxu0 0.0
    %1064 = vmatprep.subr.mxu0 0.0
    %1065 = vmatpush1.msra.mxu0 0.0
    %1066 = vmatprep.subr.mxu0 0.0
    %1067 = vmatpush1.msra.mxu0 0.0
    %1068 = vmatprep.subr.mxu0 0.0
    %1069 = vmatpush1.msra.mxu0 0.0
    %1070 = vmatprep.subr.mxu0 0.0
    %1071 = vmatpush1.msra.mxu0 0.0
    %1072 = vmatprep.subr.mxu0 0.0
    %1073 = vmatpush1.msra.mxu0 0.0
    %1074 = vmatprep.subr.mxu0 0.0
    %1075 = vmatpush1.msra.mxu0 0.0
    %1076 = vmatprep.subr.mxu0 0.0
    %1077 = vmatpush1.msra.mxu0 0.0
    %1078 = vmatprep.subr.mxu0 0.0
    %1079 = vmatpush1.msra.mxu0 0.0
    %1080 = vmatprep.subr.mxu0 0.0
    %1081 = vmatpush1.msra.mxu0 0.0
    %1082 = vmatprep.subr.mxu0 0.0
    %1083 = vmatpush1.msra.mxu0 0.0
    %1084 = vmatprep.subr.mxu0 0.0
    %1085 = vmatpush1.msra.mxu0 0.0
    %1086 = vmatprep.subr.mxu0 0.0
    %1087 = vmatpush1.msra.mxu0 0.0
    %1088 = vmatprep.subr.mxu0 0.0
    %1089 = vmatpush1.msra.mxu0 0.0
    %1090 = vmatprep.subr.mxu0 0.0
    %1091 = vmatpush1.msra.mxu0 0.0
    %1092 = vmatprep.subr.mxu0 0.0
    %1093 = vmatpush1.msra.mxu0 0.0
    %1094 = vmatprep.subr.mxu0 0.0
    %1095 = vmatpush1.msra.mxu0 0.0
    %1096 = vmatprep.subr.mxu0 0.0
    %1097 = vmatpush1.msra.mxu0 0.0
    %1098 = vmatprep.subr.mxu0 0.0
    %1099 = vmatpush1.msra.mxu0 0.0
    %1100 = vmatprep.subr.mxu0 0.0
    %1101 = vmatpush1.msra.mxu0 0.0
    %1102 = vmatprep.subr.mxu0 0.0
    %1103 = vmatpush1.msra.mxu0 0.0
    %1104 = vmatprep.subr.mxu0 0.0
    %1105 = vmatpush1.msra.mxu0 0.0
    %1106 = vmatprep.subr.mxu0 0.0
    %1107 = vmatpush1.msra.mxu0 0.0
    %1108 = vmatprep.subr.mxu0 0.0
    %1109 = vmatpush1.msra.mxu0 0.0
    %1110 = vmatprep.subr.mxu0 0.0
    %1111 = vmatpush1.msra.mxu0 0.0
    %1112 = vmatprep.subr.mxu0 0.0
    %1113 = vmatpush1.msra.mxu0 0.0
    %1114 = vmatprep.subr.mxu0 0.0
    %1115 = vmatpush1.msra.mxu0 0.0
    %1116 = vmatprep.mubr.f32.mxu0 0.0
    %1117 = vmatmul.mubr.f32.gmra.mrb[0].mxu0 %v1050
    %v1118 = vpop.f32.mrb[0].mxu0
    %v1119 = vadd.f32 0.0, %v1118
    %v1120 = vpop.f32.mrb[0].mxu0
    %1121 = vdwg.mxu0
    %v1122 = vmul.f32 %v1119, %v885
    %v1123 = vadd.f32 %v1041, %v1122
    %1124 = vrot.lane.b32.xlu0 %v957, 8
    %v1125 = vpop.permute.xlu0 %1124
    %v1127 = vmul.f32 %v934, %v1125
    %1129 = vrot.lane.b32.xlu0 %v1127, 56
    %v1130 = vpop.permute.xlu0 %1129
    %v1131 = vsel %vm963, %v1130, 0
    %1133 = vmatprep.subr.mxu0 0.0
    %1134 = vmatpush1.msra.mxu0 %v968
    %1135 = vmatprep.subr.mxu0 0.0
    %1136 = vmatpush1.msra.mxu0 0.0
    %1137 = vmatprep.subr.mxu0 0.0
    %1138 = vmatpush1.msra.mxu0 0.0
    %1139 = vmatprep.subr.mxu0 0.0
    %1140 = vmatpush1.msra.mxu0 0.0
    %1141 = vmatprep.subr.mxu0 0.0
    %1142 = vmatpush1.msra.mxu0 0.0
    %1143 = vmatprep.subr.mxu0 0.0
    %1144 = vmatpush1.msra.mxu0 0.0
    %1145 = vmatprep.subr.mxu0 0.0
    %1146 = vmatpush1.msra.mxu0 0.0
    %1147 = vmatprep.subr.mxu0 0.0
    %1148 = vmatpush1.msra.mxu0 0.0
    %1149 = vmatprep.subr.mxu0 0.0
    %1150 = vmatpush1.msra.mxu0 0.0
    %1151 = vmatprep.subr.mxu0 0.0
    %1152 = vmatpush1.msra.mxu0 0.0
    %1153 = vmatprep.subr.mxu0 0.0
    %1154 = vmatpush1.msra.mxu0 0.0
    %1155 = vmatprep.subr.mxu0 0.0
    %1156 = vmatpush1.msra.mxu0 0.0
    %1157 = vmatprep.subr.mxu0 0.0
    %1158 = vmatpush1.msra.mxu0 0.0
    %1159 = vmatprep.subr.mxu0 0.0
    %1160 = vmatpush1.msra.mxu0 0.0
    %1161 = vmatprep.subr.mxu0 0.0
    %1162 = vmatpush1.msra.mxu0 0.0
    %1163 = vmatprep.subr.mxu0 0.0
    %1164 = vmatpush1.msra.mxu0 0.0
    %1165 = vmatprep.subr.mxu0 0.0
    %1166 = vmatpush1.msra.mxu0 0.0
    %1167 = vmatprep.subr.mxu0 0.0
    %1168 = vmatpush1.msra.mxu0 0.0
    %1169 = vmatprep.subr.mxu0 0.0
    %1170 = vmatpush1.msra.mxu0 0.0
    %1171 = vmatprep.subr.mxu0 0.0
    %1172 = vmatpush1.msra.mxu0 0.0
    %1173 = vmatprep.subr.mxu0 0.0
    %1174 = vmatpush1.msra.mxu0 0.0
    %1175 = vmatprep.subr.mxu0 0.0
    %1176 = vmatpush1.msra.mxu0 0.0
    %1177 = vmatprep.subr.mxu0 0.0
    %1178 = vmatpush1.msra.mxu0 0.0
    %1179 = vmatprep.subr.mxu0 0.0
    %1180 = vmatpush1.msra.mxu0 0.0
    %1181 = vmatprep.subr.mxu0 0.0
    %1182 = vmatpush1.msra.mxu0 0.0
    %1183 = vmatprep.subr.mxu0 0.0
    %1184 = vmatpush1.msra.mxu0 0.0
    %1185 = vmatprep.subr.mxu0 0.0
    %1186 = vmatpush1.msra.mxu0 0.0
    %1187 = vmatprep.subr.mxu0 0.0
    %1188 = vmatpush1.msra.mxu0 0.0
    %1189 = vmatprep.subr.mxu0 0.0
    %1190 = vmatpush1.msra.mxu0 0.0
    %1191 = vmatprep.subr.mxu0 0.0
    %1192 = vmatpush1.msra.mxu0 0.0
    %1193 = vmatprep.subr.mxu0 0.0
    %1194 = vmatpush1.msra.mxu0 0.0
    %1195 = vmatprep.subr.mxu0 0.0
    %1196 = vmatpush1.msra.mxu0 0.0
    %1197 = vmatprep.mubr.f32.mxu0 0.0
    %1198 = vmatmul.mubr.f32.gmra.mrb[0].mxu0 %v1131
    %v1199 = vpop.f32.mrb[0].mxu0
    %v1200 = vadd.f32 0.0, %v1199
    %v1201 = vpop.f32.mrb[0].mxu0
    %1202 = vdwg.mxu0
    %v1203 = vmul.f32 %v1200, %v886
    %v1204 = vadd.f32 %v1123, %v1203
    %1205 = vrot.lane.b32.xlu0 %v957, 12
    %v1206 = vpop.permute.xlu0 %1205
    %v1208 = vmul.f32 %v940, %v1206
    %1210 = vrot.lane.b32.xlu0 %v1208, 52
    %v1211 = vpop.permute.xlu0 %1210
    %v1212 = vsel %vm963, %v1211, 0
    %1214 = vmatprep.subr.mxu0 0.0
    %1215 = vmatpush1.msra.mxu0 %v968
    %1216 = vmatprep.subr.mxu0 0.0
    %1217 = vmatpush1.msra.mxu0 0.0
    %1218 = vmatprep.subr.mxu0 0.0
    %1219 = vmatpush1.msra.mxu0 0.0
    %1220 = vmatprep.subr.mxu0 0.0
    %1221 = vmatpush1.msra.mxu0 0.0
    %1222 = vmatprep.subr.mxu0 0.0
    %1223 = vmatpush1.msra.mxu0 0.0
    %1224 = vmatprep.subr.mxu0 0.0
    %1225 = vmatpush1.msra.mxu0 0.0
    %1226 = vmatprep.subr.mxu0 0.0
    %1227 = vmatpush1.msra.mxu0 0.0
    %1228 = vmatprep.subr.mxu0 0.0
    %1229 = vmatpush1.msra.mxu0 0.0
    %1230 = vmatprep.subr.mxu0 0.0
    %1231 = vmatpush1.msra.mxu0 0.0
    %1232 = vmatprep.subr.mxu0 0.0
    %1233 = vmatpush1.msra.mxu0 0.0
    %1234 = vmatprep.subr.mxu0 0.0
    %1235 = vmatpush1.msra.mxu0 0.0
    %1236 = vmatprep.subr.mxu0 0.0
    %1237 = vmatpush1.msra.mxu0 0.0
    %1238 = vmatprep.subr.mxu0 0.0
    %1239 = vmatpush1.msra.mxu0 0.0
    %1240 = vmatprep.subr.mxu0 0.0
    %1241 = vmatpush1.msra.mxu0 0.0
    %1242 = vmatprep.subr.mxu0 0.0
    %1243 = vmatpush1.msra.mxu0 0.0
    %1244 = vmatprep.subr.mxu0 0.0
    %1245 = vmatpush1.msra.mxu0 0.0
    %1246 = vmatprep.subr.mxu0 0.0
    %1247 = vmatpush1.msra.mxu0 0.0
    %1248 = vmatprep.subr.mxu0 0.0
    %1249 = vmatpush1.msra.mxu0 0.0
    %1250 = vmatprep.subr.mxu0 0.0
    %1251 = vmatpush1.msra.mxu0 0.0
    %1252 = vmatprep.subr.mxu0 0.0
    %1253 = vmatpush1.msra.mxu0 0.0
    %1254 = vmatprep.subr.mxu0 0.0
    %1255 = vmatpush1.msra.mxu0 0.0
    %1256 = vmatprep.subr.mxu0 0.0
    %1257 = vmatpush1.msra.mxu0 0.0
    %1258 = vmatprep.subr.mxu0 0.0
    %1259 = vmatpush1.msra.mxu0 0.0
    %1260 = vmatprep.subr.mxu0 0.0
    %1261 = vmatpush1.msra.mxu0 0.0
    %1262 = vmatprep.subr.mxu0 0.0
    %1263 = vmatpush1.msra.mxu0 0.0
    %1264 = vmatprep.subr.mxu0 0.0
    %1265 = vmatpush1.msra.mxu0 0.0
    %1266 = vmatprep.subr.mxu0 0.0
    %1267 = vmatpush1.msra.mxu0 0.0
    %1268 = vmatprep.subr.mxu0 0.0
    %1269 = vmatpush1.msra.mxu0 0.0
    %1270 = vmatprep.subr.mxu0 0.0
    %1271 = vmatpush1.msra.mxu0 0.0
    %1272 = vmatprep.subr.mxu0 0.0
    %1273 = vmatpush1.msra.mxu0 0.0
    %1274 = vmatprep.subr.mxu0 0.0
    %1275 = vmatpush1.msra.mxu0 0.0
    %1276 = vmatprep.subr.mxu0 0.0
    %1277 = vmatpush1.msra.mxu0 0.0
    %1278 = vmatprep.mubr.f32.mxu0 0.0
    %1279 = vmatmul.mubr.f32.gmra.mrb[0].mxu0 %v1212
    %v1280 = vpop.f32.mrb[0].mxu0
    %v1281 = vadd.f32 0.0, %v1280
    %v1282 = vpop.f32.mrb[0].mxu0
    %1283 = vdwg.mxu0
    %v1284 = vmul.f32 %v1281, %v887
    %v1285 = vadd.f32 %v1204, %v1284
    %v1286 = vld [vmem:[%s4] sm:$0x1]
    %v1288 = vlaneseq
    %v1289 = vshrl.u32 %v1288, 7
    %v1290 = vsub.s32 0, %v1289
    %v1291 = vrot.slane %v1286, %v1290
    %v1293 = vadd.f32 %v1285, %v1291
    %vm1294 = vcmask 523264
    %1295 = vst.msk [vmem:[#allocation2] sm:$0xff] %vm1294, %v1293
    // Predicated region
    $region26: #{tpu_custom_call.1} parent=1 // pred_check
      _
    $region27: #{tpu_custom_call.1} parent=1 // pred_check_branch
      %1297 = sbr.rel (0) target = $region29
    $region28: #{tpu_custom_call.1} parent=1 // pred_region
      %s1299 = ssub.s32 128, 128
      %1300 = vsyncadd [#allocation3], %s1299
      %s1302 = sshll.u32 [#allocation2], 4
      %s1303 = int_to_ptr.vmem [resolvable:$true] %s1302
      %1305 = dma.vmem_to_hbm [thread:$0]  %s1303, 128, %s6, [#allocation3]
    $region29: #{tpu_custom_call.1} parent=1 // pred_fallthru
      _
    // Predicated region
    $region30: #{tpu_custom_call.1} parent=1 // pred_check
      _
    $region31: #{tpu_custom_call.1} parent=1 // pred_check_branch
      %1307 = sbr.rel (0) target = $region33
    $region32: #{tpu_custom_call.1} parent=1 // pred_region
      %1308 = dma.done [#allocation3], 128
    $region33: #{tpu_custom_call.1} parent=1 // pred_fallthru
      _
    %1309 = vsyncpa [#allocation3], 1

</llo_original>
